<compile_context>
chip_gen: v6e
topology: v6e:2x2x1
jax: 0.10.0
libtpu: 0.0.40
codegen_flags: <defaults>
</compile_context>

<pallas_src>
import jax
import jax.numpy as jnp
from jax import lax
from jax.experimental import pallas as pl
from jax.experimental.pallas import tpu as pltpu

_LANE = 128   # lane-tile width (feature / packed-gate axis)
_SUB = 8      # sublane-tile width (batch axis)


# ----------------------------------------------------------------------------
# Fused per-layer kernel: grid=(n_layers,); embedding is gathered outside.
# ----------------------------------------------------------------------------
def _make_kernel(H, T, Bp, W, unroll):
    """Static closure args: H real hidden size, T timesteps, Bp padded batch,
    W padded lane width (>= max(D, 4H) rounded to 128), unroll policy."""

    def kernel(xemb_ref, wih_ref, whh_ref, b_ref, h0_ref, c0_ref,
               wfc_ref, bfc_ref, o_ref, hn_ref, cn_ref, xseq_sc, gx_sc):
        # Shapes (per grid step = one LSTM layer):
        #   xemb_ref : (T*Bp, W) f32   embedded tokens (time-major, padded)
        #   wih_ref  : (1, W, W) bf16  densely packed input->gate weights
        #   whh_ref  : (1, W, W) bf16  densely packed hidden->gate weights
        #   b_ref    : (1, 1, W) f32   combined bias (b_ih + b_hh), packed
        #   h0_ref   : (1, Bp, W) f32  initial hidden; c0_ref: initial cell
        #   wfc_ref  : (W, Op) bf16    FC weight;  bfc_ref: (1, Op) f32 bias
        #   o_ref    : (Bp, Op) f32    sigmoid(FC(h_last))   (written last layer)
        #   hn_ref   : (1, Bp, W) f32  final hidden;  cn_ref: final cell
        #   xseq_sc  : (T*Bp, W) f32   layer in/out sequence (VMEM scratch)
        #   gx_sc    : (T*Bp, W) f32   hoisted x @ W_ih + bias (VMEM scratch)
        layer = pl.program_id(0)
        n_layers = pl.num_programs(0)

        # Layer 0: seed the sequence buffer with the embedded tokens.
        @pl.when(layer == 0)
        def _():
            xseq_sc[...] = xemb_ref[...]

        # Hoisted input projection for ALL timesteps at once (M = T*Bp),
        # bf16 MXU operands, f32 accumulation.
        gx_sc[...] = (
            jnp.dot(xseq_sc[...].astype(jnp.bfloat16), wih_ref[0],
                    preferred_element_type=jnp.float32)
            + b_ref[0])

        # g-gate lane mask (hoisted out of the recurrence; gates are packed
        # densely as i|f|g|o in lanes [0:4H)).
        lane = lax.broadcasted_iota(jnp.int32, (Bp, W), 1)
        g_mask = (lane >= 2 * H) & (lane < 3 * H)
        not_last_layer = layer < n_layers - 1

        def step(t, carry):
            h_prev, c_prev = carry                              # f32 (Bp, W)
            row = pl.multiple_of(t * Bp, Bp)
            gates = gx_sc[pl.ds(row, Bp), :] + jnp.dot(
                h_prev.astype(jnp.bfloat16), whh_ref[0],
                preferred_element_type=jnp.float32)             # (Bp, W)
            # ONE sigmoid + ONE tanh over the whole packed vreg; tanh only on
            # the g-gate lanes.
            act = jnp.where(g_mask, jnp.tanh(gates), jax.nn.sigmoid(gates))
            # Align f/g/o gate lanes onto the c/h lanes [0:H) via XLU rolls.
            # Lanes >= H then hold bounded garbage; zero weight rows >= H keep
            # it out of every matmul, and it is sliced off on the host.
            f_g = pltpu.roll(act, shift=W - H, axis=1)
            g_g = pltpu.roll(act, shift=W - 2 * H, axis=1)
            o_g = pltpu.roll(act, shift=W - 3 * H, axis=1)
            c_new = f_g * c_prev + act * g_g        # act carries i in [0:H)
            h_new = o_g * jnp.tanh(c_new)

            @pl.when(not_last_layer)
            def _():
                # Overwrite the consumed input slot: next layer's input.
                xseq_sc[pl.ds(row, Bp), :] = h_new

            return h_new, c_new

        h_f, c_f = lax.fori_loop(0, T, step, (h0_ref[0], c0_ref[0]),
                                 unroll=unroll)
        hn_ref[0] = h_f
        cn_ref[0] = c_f

        # FC + sigmoid head on the last layer's final hidden state.
        @pl.when(layer == n_layers - 1)
        def _():
            logits = jnp.dot(h_f.astype(jnp.bfloat16), wfc_ref[...],
                             preferred_element_type=jnp.float32) + bfc_ref[...]
            o_ref[...] = jax.nn.sigmoid(logits)

    return kernel


# ----------------------------------------------------------------------------
# Padding helpers.
# ----------------------------------------------------------------------------
def _pad2(x, rows, cols):
    """Zero-embed a 2-D matrix into the top-left corner of (rows, cols) f32."""
    out = jnp.zeros((rows, cols), jnp.float32)
    return out.at[:x.shape[0], :x.shape[1]].set(x.astype(jnp.float32))


# ----------------------------------------------------------------------------
# Parameter init (matches the PyTorch module's parameter structure).
# ----------------------------------------------------------------------------
def init_params(key, vocab_size, embedding_dim, hid_dims, n_layers, out_dims):
    ks = jax.random.split(key, 2 + 4 * n_layers + 2)
    idx = 0
    params = {}
    params["embedding"] = 0.1 * jax.random.normal(
        ks[idx], (vocab_size, embedding_dim), jnp.float32); idx += 1
    layers = []
    for l in range(n_layers):
        in_dim = embedding_dim if l == 0 else hid_dims
        w_ih = 0.1 * jax.random.normal(ks[idx], (in_dim, 4 * hid_dims), jnp.float32); idx += 1
        w_hh = 0.1 * jax.random.normal(ks[idx], (hid_dims, 4 * hid_dims), jnp.float32); idx += 1
        b_ih = 0.1 * jax.random.normal(ks[idx], (4 * hid_dims,), jnp.float32); idx += 1
        b_hh = 0.1 * jax.random.normal(ks[idx], (4 * hid_dims,), jnp.float32); idx += 1
        layers.append({"w_ih": w_ih, "w_hh": w_hh,
                       "bias": (b_ih + b_hh).reshape(1, 4 * hid_dims)})
    params["lstm"] = layers
    params["w_fc"] = 0.1 * jax.random.normal(ks[idx], (hid_dims, out_dims), jnp.float32); idx += 1
    params["b_fc"] = 0.1 * jax.random.normal(ks[idx], (1, out_dims), jnp.float32); idx += 1
    return params


# ----------------------------------------------------------------------------
# Forward wrapper: embedding gather (XLA), padding/packing, pallas_call, unpad.
# ----------------------------------------------------------------------------
def lstm_sentiment_forward(params, x_ids, h0, c0):
    """x_ids: (B, T) int; h0, c0: (n_layers, B, H). Returns (o, (h_n, c_n))."""
    emb = params["embedding"]                       # (V, D)
    D = emb.shape[1]
    H = params["lstm"][0]["w_hh"].shape[0]
    L = len(params["lstm"])
    O = params["w_fc"].shape[1]
    B, T = x_ids.shape

    W = _LANE * pl.cdiv(max(D, 4 * H), _LANE)       # packed-gate lane width
    Op = _LANE * pl.cdiv(O, _LANE)
    Bp = _SUB * pl.cdiv(B, _SUB)
    TB = T * Bp

    # Embedding lookup as an XLA gather outside the kernel (no padded table /
    # one-hot matmul in VMEM).  Time-major, batch- and lane-padded.
    x_emb = jnp.take(emb.astype(jnp.float32), x_ids.astype(jnp.int32), axis=0)
    x_emb = jnp.transpose(x_emb, (1, 0, 2))                     # (T, B, D)
    x_emb = jnp.pad(x_emb, ((0, 0), (0, Bp - B), (0, W - D)))   # (T, Bp, W)
    x_emb = x_emb.reshape(TB, W)

    # Densely packed, zero-padded weights; MXU operands in bf16, biases f32.
    def pack_w(w):  # (in_dim, 4H) -> (W, W) bf16, gates packed in cols [0:4H)
        return _pad2(w, W, W).astype(jnp.bfloat16)

    wih_p = jnp.stack([pack_w(lp["w_ih"]) for lp in params["lstm"]])   # (L,W,W)
    whh_p = jnp.stack([pack_w(lp["w_hh"]) for lp in params["lstm"]])   # (L,W,W)
    b_p = jnp.stack([_pad2(lp["bias"], 1, W) for lp in params["lstm"]])  # (L,1,W)
    h0_p = jnp.pad(h0.astype(jnp.float32), ((0, 0), (0, Bp - B), (0, W - H)))
    c0_p = jnp.pad(c0.astype(jnp.float32), ((0, 0), (0, Bp - B), (0, W - H)))
    wfc_p = _pad2(params["w_fc"], W, Op).astype(jnp.bfloat16)
    bfc_p = _pad2(params["b_fc"], 1, Op)

    # Full unroll only for short sequences; partial unroll avoids vreg spills.
    unroll = True if T <= 16 else 8

    kernel = _make_kernel(H, T, Bp, W, unroll)
    o_p, hn_p, cn_p = pl.pallas_call(
        kernel,
        out_shape=(
            jax.ShapeDtypeStruct((Bp, Op), jnp.float32),
            jax.ShapeDtypeStruct((L, Bp, W), jnp.float32),
            jax.ShapeDtypeStruct((L, Bp, W), jnp.float32),
        ),
        grid_spec=pltpu.PrefetchScalarGridSpec(
            num_scalar_prefetch=0,
            grid=(L,),   # layer axis: next layer's weights DMA behind compute
            in_specs=[
                pl.BlockSpec((TB, W), lambda l: (0, 0)),        # embedded seq
                pl.BlockSpec((1, W, W), lambda l: (l, 0, 0)),   # W_ih[l]
                pl.BlockSpec((1, W, W), lambda l: (l, 0, 0)),   # W_hh[l]
                pl.BlockSpec((1, 1, W), lambda l: (l, 0, 0)),   # bias[l]
                pl.BlockSpec((1, Bp, W), lambda l: (l, 0, 0)),  # h0[l]
                pl.BlockSpec((1, Bp, W), lambda l: (l, 0, 0)),  # c0[l]
                pl.BlockSpec((W, Op), lambda l: (0, 0)),        # W_fc
                pl.BlockSpec((1, Op), lambda l: (0, 0)),        # b_fc
            ],
            out_specs=[
                pl.BlockSpec((Bp, Op), lambda l: (0, 0)),       # sigmoid(FC)
                pl.BlockSpec((1, Bp, W), lambda l: (l, 0, 0)),  # h_n[l]
                pl.BlockSpec((1, Bp, W), lambda l: (l, 0, 0)),  # c_n[l]
            ],
            scratch_shapes=[
                pltpu.VMEM((TB, W), jnp.float32),    # layer in/out sequence
                pltpu.VMEM((TB, W), jnp.float32),    # hoisted x@W_ih + bias
            ],
        ),
        compiler_params=pltpu.CompilerParams(
            dimension_semantics=("arbitrary",)),     # layers are sequential
    )(x_emb, wih_p, whh_p, b_p, h0_p, c0_p, wfc_p, bfc_p)

    # Inter-layer / pre-FC dropout = identity (eval mode).
    o = o_p[:B, :O]
    h_n = hn_p[:, :B, :H]
    c_n = cn_p[:, :B, :H]
    return o, (h_n, c_n)


# ----------------------------------------------------------------------------
# Pure-JAX (f32) reference for a sanity check.
# ----------------------------------------------------------------------------
def _reference_forward(params, x_ids, h0, c0):
    H = h0.shape[-1]
    embed = jnp.take(params["embedding"], x_ids, axis=0)       # (B, T, D)
    layer_in = jnp.transpose(embed, (1, 0, 2))                 # (T, B, D)
    h_finals, c_finals = [], []
    for l, lp in enumerate(params["lstm"]):
        h, c = h0[l], c0[l]
        outs = []
        for t in range(layer_in.shape[0]):
            g = layer_in[t] @ lp["w_ih"] + h @ lp["w_hh"] + lp["bias"]
            i = jax.nn.sigmoid(g[:, :H]); f = jax.nn.sigmoid(g[:, H:2*H])
            gg = jnp.tanh(g[:, 2*H:3*H]); o = jax.nn.sigmoid(g[:, 3*H:])
            c = f * c + i * gg
            h = o * jnp.tanh(c)
            outs.append(h)
        layer_in = jnp.stack(outs, 0)
        h_finals.append(h); c_finals.append(c)
    o = jax.nn.sigmoid(h_finals[-1] @ params["w_fc"] + params["b_fc"])
    return o, (jnp.stack(h_finals, 0), jnp.stack(c_finals, 0))


if __name__ == "__main__":
    # Small shapes consistent with the module's forward.
    VOCAB, EMBED_DIM, HID_DIMS, N_LAYERS, OUT_DIMS = 50, 32, 32, 2, 1
    B, T = 2, 8

    key = jax.random.PRNGKey(0)
    k_param, k_x = jax.random.split(key)
    params = init_params(k_param, VOCAB, EMBED_DIM, HID_DIMS, N_LAYERS, OUT_DIMS)

    x_ids = jax.random.randint(k_x, (B, T), 0, VOCAB, dtype=jnp.int32)
    h0 = jnp.zeros((N_LAYERS, B, HID_DIMS), jnp.float32)   # init_hidden()
    c0 = jnp.zeros((N_LAYERS, B, HID_DIMS), jnp.float32)

    fwd = jax.jit(lstm_sentiment_forward)
    o, (h_n, c_n) = jax.block_until_ready(fwd(params, x_ids, h0, c0))

    o_ref, (h_ref, c_ref) = _reference_forward(params, x_ids, h0, c0)
    assert o.shape == (B, OUT_DIMS)
    assert h_n.shape == (N_LAYERS, B, HID_DIMS)
    assert c_n.shape == (N_LAYERS, B, HID_DIMS)
    # bf16 MXU operands (f32 accumulation / state): compare at 1e-2 abs tol.
    assert bool(jnp.all(jnp.isfinite(o)))
    assert jnp.allclose(o, o_ref, atol=1e-2)
    assert jnp.allclose(h_n, h_ref, atol=1e-2)
    assert jnp.allclose(c_n, c_ref, atol=1e-2)

    print("KERNEL_OK")
</pallas_src>

<mosaic_0001>
module attributes {stable_mosaic.version = 11 : i64} {
  func.func @kernel(%arg0: i32, %arg1: memref<64x128xf32, #tpu.memory_space<vmem>>, %arg2: memref<1x128x128xbf16, #tpu.memory_space<vmem>>, %arg3: memref<1x128x128xbf16, #tpu.memory_space<vmem>>, %arg4: memref<1x1x128xf32, #tpu.memory_space<vmem>>, %arg5: memref<1x8x128xf32, #tpu.memory_space<vmem>>, %arg6: memref<1x8x128xf32, #tpu.memory_space<vmem>>, %arg7: memref<128x128xbf16, #tpu.memory_space<vmem>>, %arg8: memref<1x128xf32, #tpu.memory_space<vmem>>, %arg9: memref<8x128xf32, #tpu.memory_space<vmem>>, %arg10: memref<1x8x128xf32, #tpu.memory_space<vmem>>, %arg11: memref<1x8x128xf32, #tpu.memory_space<vmem>>, %arg12: memref<64x128xf32, #tpu.memory_space<vmem>>, %arg13: memref<64x128xf32, #tpu.memory_space<vmem>>) attributes {dimension_semantics = [#tpu.dimension_semantics<arbitrary>], iteration_bounds = array<i64: 2>, scalar_prefetch = 0 : i64, scratch_operands = 2 : i64, tpu.core_type = #tpu.core_type<tc>, window_params = [{pipeline_mode = #tpu.pipeline_mode<synchronous>, transform_indices = @transform_0, window_bounds = array<i64: 64, 128>}, {transform_indices = @transform_1, window_bounds = array<i64: 1, 128, 128>}, {transform_indices = @transform_2, window_bounds = array<i64: 1, 128, 128>}, {transform_indices = @transform_3, window_bounds = array<i64: 1, 1, 128>}, {transform_indices = @transform_4, window_bounds = array<i64: 1, 8, 128>}, {transform_indices = @transform_5, window_bounds = array<i64: 1, 8, 128>}, {pipeline_mode = #tpu.pipeline_mode<synchronous>, transform_indices = @transform_6, window_bounds = array<i64: 128, 128>}, {pipeline_mode = #tpu.pipeline_mode<synchronous>, transform_indices = @transform_7, window_bounds = array<i64: 1, 128>}, {pipeline_mode = #tpu.pipeline_mode<synchronous>, transform_indices = @transform_8, window_bounds = array<i64: 8, 128>}, {transform_indices = @transform_9, window_bounds = array<i64: 1, 8, 128>}, {transform_indices = @transform_10, window_bounds = array<i64: 1, 8, 128>}]} {
    %c0_i32 = arith.constant 0 : i32
    %0 = arith.cmpi eq, %arg0, %c0_i32 : i32
    %1 = arith.extui %0 : i1 to i32
    %c0_i32_0 = arith.constant 0 : i32
    %2 = arith.cmpi ne, %1, %c0_i32_0 : i32
    scf.if %2 {
      %c0_113 = arith.constant 0 : index
      %c0_114 = arith.constant 0 : index
      %241 = vector.load %arg1[%c0_113, %c0_114] : memref<64x128xf32, #tpu.memory_space<vmem>>, vector<64x128xf32>
      %c0_115 = arith.constant 0 : index
      %c0_116 = arith.constant 0 : index
      %242 = vector.load %arg12[%c0_115, %c0_116] : memref<64x128xf32, #tpu.memory_space<vmem>>, vector<64x128xf32>
      tpu.vector_store %arg12[%c0_115, %c0_116], %241 {strides = array<i32>} : memref<64x128xf32, #tpu.memory_space<vmem>>, vector<64x128xf32>,
    } else {
    }
    %c0 = arith.constant 0 : index
    %c0_1 = arith.constant 0 : index
    %3 = vector.load %arg12[%c0, %c0_1] : memref<64x128xf32, #tpu.memory_space<vmem>>, vector<64x128xf32>
    %4 = arith.truncf %3 : vector<64x128xf32> to vector<64x128xbf16>
    %c0_2 = arith.constant 0 : index
    %c0_3 = arith.constant 0 : index
    %c0_4 = arith.constant 0 : index
    %5 = vector.load %arg2[%c0_2, %c0_3, %c0_4] : memref<1x128x128xbf16, #tpu.memory_space<vmem>>, vector<1x128x128xbf16>
    %6 = vector.shape_cast %5 : vector<1x128x128xbf16> to vector<128x128xbf16>
    %cst = arith.constant dense<0.000000e+00> : vector<64x128xf32>
    %7 = tpu.matmul %4, %6, %cst {dimension_numbers = #tpu.dot_dimension_numbers<[1], [0], [0], [1], [0, 0, 1, 1], [], []>} : vector<64x128xbf16>, vector<128x128xbf16>, vector<64x128xf32> -> vector<64x128xf32>
    %c0_5 = arith.constant 0 : index
    %c0_6 = arith.constant 0 : index
    %c0_7 = arith.constant 0 : index
    %8 = vector.load %arg4[%c0_5, %c0_6, %c0_7] : memref<1x1x128xf32, #tpu.memory_space<vmem>>, vector<1x1x128xf32>
    %9 = vector.shape_cast %8 : vector<1x1x128xf32> to vector<1x128xf32>
    %10 = vector.broadcast %9 : vector<1x128xf32> to vector<64x128xf32>
    %11 = arith.addf %7, %10 : vector<64x128xf32>
    %c0_8 = arith.constant 0 : index
    %c0_9 = arith.constant 0 : index
    %12 = vector.load %arg13[%c0_8, %c0_9] : memref<64x128xf32, #tpu.memory_space<vmem>>, vector<64x128xf32>
    tpu.vector_store %arg13[%c0_8, %c0_9], %11 {strides = array<i32>} : memref<64x128xf32, #tpu.memory_space<vmem>>, vector<64x128xf32>,
    %13 = tpu.iota {dimensions = array<i32: 1>} : vector<8x128xi32>
    %c64_i32 = arith.constant 64 : i32
    %14 = vector.broadcast %c64_i32 : i32 to vector<8x128xi32>
    %15 = arith.cmpi sge, %13, %14 : vector<8x128xi32>
    %c96_i32 = arith.constant 96 : i32
    %16 = vector.broadcast %c96_i32 : i32 to vector<8x128xi32>
    %17 = arith.cmpi slt, %13, %16 : vector<8x128xi32>
    %18 = arith.andi %15, %17 : vector<8x128xi1>
    %c1_i32 = arith.constant 1 : i32
    %19 = arith.cmpi slt, %arg0, %c1_i32 : i32
    %c0_10 = arith.constant 0 : index
    %c0_11 = arith.constant 0 : index
    %c0_12 = arith.constant 0 : index
    %20 = vector.load %arg5[%c0_10, %c0_11, %c0_12] : memref<1x8x128xf32, #tpu.memory_space<vmem>>, vector<1x8x128xf32>
    %21 = vector.shape_cast %20 : vector<1x8x128xf32> to vector<8x128xf32>
    %c0_13 = arith.constant 0 : index
    %c0_14 = arith.constant 0 : index
    %c0_15 = arith.constant 0 : index
    %22 = vector.load %arg6[%c0_13, %c0_14, %c0_15] : memref<1x8x128xf32, #tpu.memory_space<vmem>>, vector<1x8x128xf32>
    %23 = vector.shape_cast %22 : vector<1x8x128xf32> to vector<8x128xf32>
    %c0_i32_16 = arith.constant 0 : i32
    %c8_i32 = arith.constant 8 : i32
    %24 = arith.muli %c0_i32_16, %c8_i32 : i32
    %25 = tpu.assume_multiple %24, 8 : i32
    %26 = arith.index_cast %25 : i32 to index
    %c0_17 = arith.constant 0 : index
    %27 = vector.load %arg13[%26, %c0_17] : memref<64x128xf32, #tpu.memory_space<vmem>>, vector<8x128xf32>
    %28 = arith.truncf %21 : vector<8x128xf32> to vector<8x128xbf16>
    %c0_18 = arith.constant 0 : index
    %c0_19 = arith.constant 0 : index
    %c0_20 = arith.constant 0 : index
    %29 = vector.load %arg3[%c0_18, %c0_19, %c0_20] : memref<1x128x128xbf16, #tpu.memory_space<vmem>>, vector<1x128x128xbf16>
    %30 = vector.shape_cast %29 : vector<1x128x128xbf16> to vector<128x128xbf16>
    %cst_21 = arith.constant dense<0.000000e+00> : vector<8x128xf32>
    %31 = tpu.matmul %28, %30, %cst_21 {dimension_numbers = #tpu.dot_dimension_numbers<[1], [0], [0], [1], [0, 0, 1, 1], [], []>} : vector<8x128xbf16>, vector<128x128xbf16>, vector<8x128xf32> -> vector<8x128xf32>
    %32 = arith.addf %27, %31 : vector<8x128xf32>
    %33 = math.tanh %32 : vector<8x128xf32>
    %34 = arith.negf %32 : vector<8x128xf32>
    %35 = math.exp %34 : vector<8x128xf32>
    %cst_22 = arith.constant 1.000000e+00 : f32
    %36 = vector.broadcast %cst_22 : f32 to vector<8x128xf32>
    %37 = arith.addf %36, %35 : vector<8x128xf32>
    %38 = arith.divf %36, %37 : vector<8x128xf32>
    %39 = arith.select %18, %33, %38 : vector<8x128xi1>, vector<8x128xf32>
    %c96_i32_23 = arith.constant 96 : i32
    %40 = tpu.dynamic_rotate %39 by %c96_i32_23 dim 1 : vector<8x128xf32>, i32 -> vector<8x128xf32>
    %c64_i32_24 = arith.constant 64 : i32
    %41 = tpu.dynamic_rotate %39 by %c64_i32_24 dim 1 : vector<8x128xf32>, i32 -> vector<8x128xf32>
    %c32_i32 = arith.constant 32 : i32
    %42 = tpu.dynamic_rotate %39 by %c32_i32 dim 1 : vector<8x128xf32>, i32 -> vector<8x128xf32>
    %43 = arith.mulf %40, %23 : vector<8x128xf32>
    %44 = arith.mulf %39, %41 : vector<8x128xf32>
    %45 = arith.addf %43, %44 : vector<8x128xf32>
    %46 = math.tanh %45 : vector<8x128xf32>
    %47 = arith.mulf %42, %46 : vector<8x128xf32>
    %48 = arith.extui %19 : i1 to i32
    %c0_i32_25 = arith.constant 0 : i32
    %49 = arith.cmpi ne, %48, %c0_i32_25 : i32
    scf.if %49 {
      %241 = arith.index_cast %25 : i32 to index
      %c0_113 = arith.constant 0 : index
      %242 = vector.load %arg12[%241, %c0_113] : memref<64x128xf32, #tpu.memory_space<vmem>>, vector<8x128xf32>
      tpu.vector_store %arg12[%241, %c0_113], %47 {strides = array<i32>} : memref<64x128xf32, #tpu.memory_space<vmem>>, vector<8x128xf32>,
    } else {
    }
    %c1_i32_26 = arith.constant 1 : i32
    %c8_i32_27 = arith.constant 8 : i32
    %50 = arith.muli %c1_i32_26, %c8_i32_27 : i32
    %51 = tpu.assume_multiple %50, 8 : i32
    %52 = arith.index_cast %51 : i32 to index
    %c0_28 = arith.constant 0 : index
    %53 = vector.load %arg13[%52, %c0_28] : memref<64x128xf32, #tpu.memory_space<vmem>>, vector<8x128xf32>
    %54 = arith.truncf %47 : vector<8x128xf32> to vector<8x128xbf16>
    %c0_29 = arith.constant 0 : index
    %c0_30 = arith.constant 0 : index
    %c0_31 = arith.constant 0 : index
    %55 = vector.load %arg3[%c0_29, %c0_30, %c0_31] : memref<1x128x128xbf16, #tpu.memory_space<vmem>>, vector<1x128x128xbf16>
    %56 = vector.shape_cast %55 : vector<1x128x128xbf16> to vector<128x128xbf16>
    %cst_32 = arith.constant dense<0.000000e+00> : vector<8x128xf32>
    %57 = tpu.matmul %54, %56, %cst_32 {dimension_numbers = #tpu.dot_dimension_numbers<[1], [0], [0], [1], [0, 0, 1, 1], [], []>} : vector<8x128xbf16>, vector<128x128xbf16>, vector<8x128xf32> -> vector<8x128xf32>
    %58 = arith.addf %53, %57 : vector<8x128xf32>
    %59 = math.tanh %58 : vector<8x128xf32>
    %60 = arith.negf %58 : vector<8x128xf32>
    %61 = math.exp %60 : vector<8x128xf32>
    %cst_33 = arith.constant 1.000000e+00 : f32
    %62 = vector.broadcast %cst_33 : f32 to vector<8x128xf32>
    %63 = arith.addf %62, %61 : vector<8x128xf32>
    %64 = arith.divf %62, %63 : vector<8x128xf32>
    %65 = arith.select %18, %59, %64 : vector<8x128xi1>, vector<8x128xf32>
    %c96_i32_34 = arith.constant 96 : i32
    %66 = tpu.dynamic_rotate %65 by %c96_i32_34 dim 1 : vector<8x128xf32>, i32 -> vector<8x128xf32>
    %c64_i32_35 = arith.constant 64 : i32
    %67 = tpu.dynamic_rotate %65 by %c64_i32_35 dim 1 : vector<8x128xf32>, i32 -> vector<8x128xf32>
    %c32_i32_36 = arith.constant 32 : i32
    %68 = tpu.dynamic_rotate %65 by %c32_i32_36 dim 1 : vector<8x128xf32>, i32 -> vector<8x128xf32>
    %69 = arith.mulf %66, %45 : vector<8x128xf32>
    %70 = arith.mulf %65, %67 : vector<8x128xf32>
    %71 = arith.addf %69, %70 : vector<8x128xf32>
    %72 = math.tanh %71 : vector<8x128xf32>
    %73 = arith.mulf %68, %72 : vector<8x128xf32>
    %74 = arith.extui %19 : i1 to i32
    %c0_i32_37 = arith.constant 0 : i32
    %75 = arith.cmpi ne, %74, %c0_i32_37 : i32
    scf.if %75 {
      %241 = arith.index_cast %51 : i32 to index
      %c0_113 = arith.constant 0 : index
      %242 = vector.load %arg12[%241, %c0_113] : memref<64x128xf32, #tpu.memory_space<vmem>>, vector<8x128xf32>
      tpu.vector_store %arg12[%241, %c0_113], %73 {strides = array<i32>} : memref<64x128xf32, #tpu.memory_space<vmem>>, vector<8x128xf32>,
    } else {
    }
    %c2_i32 = arith.constant 2 : i32
    %c8_i32_38 = arith.constant 8 : i32
    %76 = arith.muli %c2_i32, %c8_i32_38 : i32
    %77 = tpu.assume_multiple %76, 8 : i32
    %78 = arith.index_cast %77 : i32 to index
    %c0_39 = arith.constant 0 : index
    %79 = vector.load %arg13[%78, %c0_39] : memref<64x128xf32, #tpu.memory_space<vmem>>, vector<8x128xf32>
    %80 = arith.truncf %73 : vector<8x128xf32> to vector<8x128xbf16>
    %c0_40 = arith.constant 0 : index
    %c0_41 = arith.constant 0 : index
    %c0_42 = arith.constant 0 : index
    %81 = vector.load %arg3[%c0_40, %c0_41, %c0_42] : memref<1x128x128xbf16, #tpu.memory_space<vmem>>, vector<1x128x128xbf16>
    %82 = vector.shape_cast %81 : vector<1x128x128xbf16> to vector<128x128xbf16>
    %cst_43 = arith.constant dense<0.000000e+00> : vector<8x128xf32>
    %83 = tpu.matmul %80, %82, %cst_43 {dimension_numbers = #tpu.dot_dimension_numbers<[1], [0], [0], [1], [0, 0, 1, 1], [], []>} : vector<8x128xbf16>, vector<128x128xbf16>, vector<8x128xf32> -> vector<8x128xf32>
    %84 = arith.addf %79, %83 : vector<8x128xf32>
    %85 = math.tanh %84 : vector<8x128xf32>
    %86 = arith.negf %84 : vector<8x128xf32>
    %87 = math.exp %86 : vector<8x128xf32>
    %cst_44 = arith.constant 1.000000e+00 : f32
    %88 = vector.broadcast %cst_44 : f32 to vector<8x128xf32>
    %89 = arith.addf %88, %87 : vector<8x128xf32>
    %90 = arith.divf %88, %89 : vector<8x128xf32>
    %91 = arith.select %18, %85, %90 : vector<8x128xi1>, vector<8x128xf32>
    %c96_i32_45 = arith.constant 96 : i32
    %92 = tpu.dynamic_rotate %91 by %c96_i32_45 dim 1 : vector<8x128xf32>, i32 -> vector<8x128xf32>
    %c64_i32_46 = arith.constant 64 : i32
    %93 = tpu.dynamic_rotate %91 by %c64_i32_46 dim 1 : vector<8x128xf32>, i32 -> vector<8x128xf32>
    %c32_i32_47 = arith.constant 32 : i32
    %94 = tpu.dynamic_rotate %91 by %c32_i32_47 dim 1 : vector<8x128xf32>, i32 -> vector<8x128xf32>
    %95 = arith.mulf %92, %71 : vector<8x128xf32>
    %96 = arith.mulf %91, %93 : vector<8x128xf32>
    %97 = arith.addf %95, %96 : vector<8x128xf32>
    %98 = math.tanh %97 : vector<8x128xf32>
    %99 = arith.mulf %94, %98 : vector<8x128xf32>
    %100 = arith.extui %19 : i1 to i32
    %c0_i32_48 = arith.constant 0 : i32
    %101 = arith.cmpi ne, %100, %c0_i32_48 : i32
    scf.if %101 {
      %241 = arith.index_cast %77 : i32 to index
      %c0_113 = arith.constant 0 : index
      %242 = vector.load %arg12[%241, %c0_113] : memref<64x128xf32, #tpu.memory_space<vmem>>, vector<8x128xf32>
      tpu.vector_store %arg12[%241, %c0_113], %99 {strides = array<i32>} : memref<64x128xf32, #tpu.memory_space<vmem>>, vector<8x128xf32>,
    } else {
    }
    %c3_i32 = arith.constant 3 : i32
    %c8_i32_49 = arith.constant 8 : i32
    %102 = arith.muli %c3_i32, %c8_i32_49 : i32
    %103 = tpu.assume_multiple %102, 8 : i32
    %104 = arith.index_cast %103 : i32 to index
    %c0_50 = arith.constant 0 : index
    %105 = vector.load %arg13[%104, %c0_50] : memref<64x128xf32, #tpu.memory_space<vmem>>, vector<8x128xf32>
    %106 = arith.truncf %99 : vector<8x128xf32> to vector<8x128xbf16>
    %c0_51 = arith.constant 0 : index
    %c0_52 = arith.constant 0 : index
    %c0_53 = arith.constant 0 : index
    %107 = vector.load %arg3[%c0_51, %c0_52, %c0_53] : memref<1x128x128xbf16, #tpu.memory_space<vmem>>, vector<1x128x128xbf16>
    %108 = vector.shape_cast %107 : vector<1x128x128xbf16> to vector<128x128xbf16>
    %cst_54 = arith.constant dense<0.000000e+00> : vector<8x128xf32>
    %109 = tpu.matmul %106, %108, %cst_54 {dimension_numbers = #tpu.dot_dimension_numbers<[1], [0], [0], [1], [0, 0, 1, 1], [], []>} : vector<8x128xbf16>, vector<128x128xbf16>, vector<8x128xf32> -> vector<8x128xf32>
    %110 = arith.addf %105, %109 : vector<8x128xf32>
    %111 = math.tanh %110 : vector<8x128xf32>
    %112 = arith.negf %110 : vector<8x128xf32>
    %113 = math.exp %112 : vector<8x128xf32>
    %cst_55 = arith.constant 1.000000e+00 : f32
    %114 = vector.broadcast %cst_55 : f32 to vector<8x128xf32>
    %115 = arith.addf %114, %113 : vector<8x128xf32>
    %116 = arith.divf %114, %115 : vector<8x128xf32>
    %117 = arith.select %18, %111, %116 : vector<8x128xi1>, vector<8x128xf32>
    %c96_i32_56 = arith.constant 96 : i32
    %118 = tpu.dynamic_rotate %117 by %c96_i32_56 dim 1 : vector<8x128xf32>, i32 -> vector<8x128xf32>
    %c64_i32_57 = arith.constant 64 : i32
    %119 = tpu.dynamic_rotate %117 by %c64_i32_57 dim 1 : vector<8x128xf32>, i32 -> vector<8x128xf32>
    %c32_i32_58 = arith.constant 32 : i32
    %120 = tpu.dynamic_rotate %117 by %c32_i32_58 dim 1 : vector<8x128xf32>, i32 -> vector<8x128xf32>
    %121 = arith.mulf %118, %97 : vector<8x128xf32>
    %122 = arith.mulf %117, %119 : vector<8x128xf32>
    %123 = arith.addf %121, %122 : vector<8x128xf32>
    %124 = math.tanh %123 : vector<8x128xf32>
    %125 = arith.mulf %120, %124 : vector<8x128xf32>
    %126 = arith.extui %19 : i1 to i32
    %c0_i32_59 = arith.constant 0 : i32
    %127 = arith.cmpi ne, %126, %c0_i32_59 : i32
    scf.if %127 {
      %241 = arith.index_cast %103 : i32 to index
      %c0_113 = arith.constant 0 : index
      %242 = vector.load %arg12[%241, %c0_113] : memref<64x128xf32, #tpu.memory_space<vmem>>, vector<8x128xf32>
      tpu.vector_store %arg12[%241, %c0_113], %125 {strides = array<i32>} : memref<64x128xf32, #tpu.memory_space<vmem>>, vector<8x128xf32>,
    } else {
    }
    %c4_i32 = arith.constant 4 : i32
    %c8_i32_60 = arith.constant 8 : i32
    %128 = arith.muli %c4_i32, %c8_i32_60 : i32
    %129 = tpu.assume_multiple %128, 8 : i32
    %130 = arith.index_cast %129 : i32 to index
    %c0_61 = arith.constant 0 : index
    %131 = vector.load %arg13[%130, %c0_61] : memref<64x128xf32, #tpu.memory_space<vmem>>, vector<8x128xf32>
    %132 = arith.truncf %125 : vector<8x128xf32> to vector<8x128xbf16>
    %c0_62 = arith.constant 0 : index
    %c0_63 = arith.constant 0 : index
    %c0_64 = arith.constant 0 : index
    %133 = vector.load %arg3[%c0_62, %c0_63, %c0_64] : memref<1x128x128xbf16, #tpu.memory_space<vmem>>, vector<1x128x128xbf16>
    %134 = vector.shape_cast %133 : vector<1x128x128xbf16> to vector<128x128xbf16>
    %cst_65 = arith.constant dense<0.000000e+00> : vector<8x128xf32>
    %135 = tpu.matmul %132, %134, %cst_65 {dimension_numbers = #tpu.dot_dimension_numbers<[1], [0], [0], [1], [0, 0, 1, 1], [], []>} : vector<8x128xbf16>, vector<128x128xbf16>, vector<8x128xf32> -> vector<8x128xf32>
    %136 = arith.addf %131, %135 : vector<8x128xf32>
    %137 = math.tanh %136 : vector<8x128xf32>
    %138 = arith.negf %136 : vector<8x128xf32>
    %139 = math.exp %138 : vector<8x128xf32>
    %cst_66 = arith.constant 1.000000e+00 : f32
    %140 = vector.broadcast %cst_66 : f32 to vector<8x128xf32>
    %141 = arith.addf %140, %139 : vector<8x128xf32>
    %142 = arith.divf %140, %141 : vector<8x128xf32>
    %143 = arith.select %18, %137, %142 : vector<8x128xi1>, vector<8x128xf32>
    %c96_i32_67 = arith.constant 96 : i32
    %144 = tpu.dynamic_rotate %143 by %c96_i32_67 dim 1 : vector<8x128xf32>, i32 -> vector<8x128xf32>
    %c64_i32_68 = arith.constant 64 : i32
    %145 = tpu.dynamic_rotate %143 by %c64_i32_68 dim 1 : vector<8x128xf32>, i32 -> vector<8x128xf32>
    %c32_i32_69 = arith.constant 32 : i32
    %146 = tpu.dynamic_rotate %143 by %c32_i32_69 dim 1 : vector<8x128xf32>, i32 -> vector<8x128xf32>
    %147 = arith.mulf %144, %123 : vector<8x128xf32>
    %148 = arith.mulf %143, %145 : vector<8x128xf32>
    %149 = arith.addf %147, %148 : vector<8x128xf32>
    %150 = math.tanh %149 : vector<8x128xf32>
    %151 = arith.mulf %146, %150 : vector<8x128xf32>
    %152 = arith.extui %19 : i1 to i32
    %c0_i32_70 = arith.constant 0 : i32
    %153 = arith.cmpi ne, %152, %c0_i32_70 : i32
    scf.if %153 {
      %241 = arith.index_cast %129 : i32 to index
      %c0_113 = arith.constant 0 : index
      %242 = vector.load %arg12[%241, %c0_113] : memref<64x128xf32, #tpu.memory_space<vmem>>, vector<8x128xf32>
      tpu.vector_store %arg12[%241, %c0_113], %151 {strides = array<i32>} : memref<64x128xf32, #tpu.memory_space<vmem>>, vector<8x128xf32>,
    } else {
    }
    %c5_i32 = arith.constant 5 : i32
    %c8_i32_71 = arith.constant 8 : i32
    %154 = arith.muli %c5_i32, %c8_i32_71 : i32
    %155 = tpu.assume_multiple %154, 8 : i32
    %156 = arith.index_cast %155 : i32 to index
    %c0_72 = arith.constant 0 : index
    %157 = vector.load %arg13[%156, %c0_72] : memref<64x128xf32, #tpu.memory_space<vmem>>, vector<8x128xf32>
    %158 = arith.truncf %151 : vector<8x128xf32> to vector<8x128xbf16>
    %c0_73 = arith.constant 0 : index
    %c0_74 = arith.constant 0 : index
    %c0_75 = arith.constant 0 : index
    %159 = vector.load %arg3[%c0_73, %c0_74, %c0_75] : memref<1x128x128xbf16, #tpu.memory_space<vmem>>, vector<1x128x128xbf16>
    %160 = vector.shape_cast %159 : vector<1x128x128xbf16> to vector<128x128xbf16>
    %cst_76 = arith.constant dense<0.000000e+00> : vector<8x128xf32>
    %161 = tpu.matmul %158, %160, %cst_76 {dimension_numbers = #tpu.dot_dimension_numbers<[1], [0], [0], [1], [0, 0, 1, 1], [], []>} : vector<8x128xbf16>, vector<128x128xbf16>, vector<8x128xf32> -> vector<8x128xf32>
    %162 = arith.addf %157, %161 : vector<8x128xf32>
    %163 = math.tanh %162 : vector<8x128xf32>
    %164 = arith.negf %162 : vector<8x128xf32>
    %165 = math.exp %164 : vector<8x128xf32>
    %cst_77 = arith.constant 1.000000e+00 : f32
    %166 = vector.broadcast %cst_77 : f32 to vector<8x128xf32>
    %167 = arith.addf %166, %165 : vector<8x128xf32>
    %168 = arith.divf %166, %167 : vector<8x128xf32>
    %169 = arith.select %18, %163, %168 : vector<8x128xi1>, vector<8x128xf32>
    %c96_i32_78 = arith.constant 96 : i32
    %170 = tpu.dynamic_rotate %169 by %c96_i32_78 dim 1 : vector<8x128xf32>, i32 -> vector<8x128xf32>
    %c64_i32_79 = arith.constant 64 : i32
    %171 = tpu.dynamic_rotate %169 by %c64_i32_79 dim 1 : vector<8x128xf32>, i32 -> vector<8x128xf32>
    %c32_i32_80 = arith.constant 32 : i32
    %172 = tpu.dynamic_rotate %169 by %c32_i32_80 dim 1 : vector<8x128xf32>, i32 -> vector<8x128xf32>
    %173 = arith.mulf %170, %149 : vector<8x128xf32>
    %174 = arith.mulf %169, %171 : vector<8x128xf32>
    %175 = arith.addf %173, %174 : vector<8x128xf32>
    %176 = math.tanh %175 : vector<8x128xf32>
    %177 = arith.mulf %172, %176 : vector<8x128xf32>
    %178 = arith.extui %19 : i1 to i32
    %c0_i32_81 = arith.constant 0 : i32
    %179 = arith.cmpi ne, %178, %c0_i32_81 : i32
    scf.if %179 {
      %241 = arith.index_cast %155 : i32 to index
      %c0_113 = arith.constant 0 : index
      %242 = vector.load %arg12[%241, %c0_113] : memref<64x128xf32, #tpu.memory_space<vmem>>, vector<8x128xf32>
      tpu.vector_store %arg12[%241, %c0_113], %177 {strides = array<i32>} : memref<64x128xf32, #tpu.memory_space<vmem>>, vector<8x128xf32>,
    } else {
    }
    %c6_i32 = arith.constant 6 : i32
    %c8_i32_82 = arith.constant 8 : i32
    %180 = arith.muli %c6_i32, %c8_i32_82 : i32
    %181 = tpu.assume_multiple %180, 8 : i32
    %182 = arith.index_cast %181 : i32 to index
    %c0_83 = arith.constant 0 : index
    %183 = vector.load %arg13[%182, %c0_83] : memref<64x128xf32, #tpu.memory_space<vmem>>, vector<8x128xf32>
    %184 = arith.truncf %177 : vector<8x128xf32> to vector<8x128xbf16>
    %c0_84 = arith.constant 0 : index
    %c0_85 = arith.constant 0 : index
    %c0_86 = arith.constant 0 : index
    %185 = vector.load %arg3[%c0_84, %c0_85, %c0_86] : memref<1x128x128xbf16, #tpu.memory_space<vmem>>, vector<1x128x128xbf16>
    %186 = vector.shape_cast %185 : vector<1x128x128xbf16> to vector<128x128xbf16>
    %cst_87 = arith.constant dense<0.000000e+00> : vector<8x128xf32>
    %187 = tpu.matmul %184, %186, %cst_87 {dimension_numbers = #tpu.dot_dimension_numbers<[1], [0], [0], [1], [0, 0, 1, 1], [], []>} : vector<8x128xbf16>, vector<128x128xbf16>, vector<8x128xf32> -> vector<8x128xf32>
    %188 = arith.addf %183, %187 : vector<8x128xf32>
    %189 = math.tanh %188 : vector<8x128xf32>
    %190 = arith.negf %188 : vector<8x128xf32>
    %191 = math.exp %190 : vector<8x128xf32>
    %cst_88 = arith.constant 1.000000e+00 : f32
    %192 = vector.broadcast %cst_88 : f32 to vector<8x128xf32>
    %193 = arith.addf %192, %191 : vector<8x128xf32>
    %194 = arith.divf %192, %193 : vector<8x128xf32>
    %195 = arith.select %18, %189, %194 : vector<8x128xi1>, vector<8x128xf32>
    %c96_i32_89 = arith.constant 96 : i32
    %196 = tpu.dynamic_rotate %195 by %c96_i32_89 dim 1 : vector<8x128xf32>, i32 -> vector<8x128xf32>
    %c64_i32_90 = arith.constant 64 : i32
    %197 = tpu.dynamic_rotate %195 by %c64_i32_90 dim 1 : vector<8x128xf32>, i32 -> vector<8x128xf32>
    %c32_i32_91 = arith.constant 32 : i32
    %198 = tpu.dynamic_rotate %195 by %c32_i32_91 dim 1 : vector<8x128xf32>, i32 -> vector<8x128xf32>
    %199 = arith.mulf %196, %175 : vector<8x128xf32>
    %200 = arith.mulf %195, %197 : vector<8x128xf32>
    %201 = arith.addf %199, %200 : vector<8x128xf32>
    %202 = math.tanh %201 : vector<8x128xf32>
    %203 = arith.mulf %198, %202 : vector<8x128xf32>
    %204 = arith.extui %19 : i1 to i32
    %c0_i32_92 = arith.constant 0 : i32
    %205 = arith.cmpi ne, %204, %c0_i32_92 : i32
    scf.if %205 {
      %241 = arith.index_cast %181 : i32 to index
      %c0_113 = arith.constant 0 : index
      %242 = vector.load %arg12[%241, %c0_113] : memref<64x128xf32, #tpu.memory_space<vmem>>, vector<8x128xf32>
      tpu.vector_store %arg12[%241, %c0_113], %203 {strides = array<i32>} : memref<64x128xf32, #tpu.memory_space<vmem>>, vector<8x128xf32>,
    } else {
    }
    %c7_i32 = arith.constant 7 : i32
    %c8_i32_93 = arith.constant 8 : i32
    %206 = arith.muli %c7_i32, %c8_i32_93 : i32
    %207 = tpu.assume_multiple %206, 8 : i32
    %208 = arith.index_cast %207 : i32 to index
    %c0_94 = arith.constant 0 : index
    %209 = vector.load %arg13[%208, %c0_94] : memref<64x128xf32, #tpu.memory_space<vmem>>, vector<8x128xf32>
    %210 = arith.truncf %203 : vector<8x128xf32> to vector<8x128xbf16>
    %c0_95 = arith.constant 0 : index
    %c0_96 = arith.constant 0 : index
    %c0_97 = arith.constant 0 : index
    %211 = vector.load %arg3[%c0_95, %c0_96, %c0_97] : memref<1x128x128xbf16, #tpu.memory_space<vmem>>, vector<1x128x128xbf16>
    %212 = vector.shape_cast %211 : vector<1x128x128xbf16> to vector<128x128xbf16>
    %cst_98 = arith.constant dense<0.000000e+00> : vector<8x128xf32>
    %213 = tpu.matmul %210, %212, %cst_98 {dimension_numbers = #tpu.dot_dimension_numbers<[1], [0], [0], [1], [0, 0, 1, 1], [], []>} : vector<8x128xbf16>, vector<128x128xbf16>, vector<8x128xf32> -> vector<8x128xf32>
    %214 = arith.addf %209, %213 : vector<8x128xf32>
    %215 = math.tanh %214 : vector<8x128xf32>
    %216 = arith.negf %214 : vector<8x128xf32>
    %217 = math.exp %216 : vector<8x128xf32>
    %cst_99 = arith.constant 1.000000e+00 : f32
    %218 = vector.broadcast %cst_99 : f32 to vector<8x128xf32>
    %219 = arith.addf %218, %217 : vector<8x128xf32>
    %220 = arith.divf %218, %219 : vector<8x128xf32>
    %221 = arith.select %18, %215, %220 : vector<8x128xi1>, vector<8x128xf32>
    %c96_i32_100 = arith.constant 96 : i32
    %222 = tpu.dynamic_rotate %221 by %c96_i32_100 dim 1 : vector<8x128xf32>, i32 -> vector<8x128xf32>
    %c64_i32_101 = arith.constant 64 : i32
    %223 = tpu.dynamic_rotate %221 by %c64_i32_101 dim 1 : vector<8x128xf32>, i32 -> vector<8x128xf32>
    %c32_i32_102 = arith.constant 32 : i32
    %224 = tpu.dynamic_rotate %221 by %c32_i32_102 dim 1 : vector<8x128xf32>, i32 -> vector<8x128xf32>
    %225 = arith.mulf %222, %201 : vector<8x128xf32>
    %226 = arith.mulf %221, %223 : vector<8x128xf32>
    %227 = arith.addf %225, %226 : vector<8x128xf32>
    %228 = math.tanh %227 : vector<8x128xf32>
    %229 = arith.mulf %224, %228 : vector<8x128xf32>
    %230 = arith.extui %19 : i1 to i32
    %c0_i32_103 = arith.constant 0 : i32
    %231 = arith.cmpi ne, %230, %c0_i32_103 : i32
    scf.if %231 {
      %241 = arith.index_cast %207 : i32 to index
      %c0_113 = arith.constant 0 : index
      %242 = vector.load %arg12[%241, %c0_113] : memref<64x128xf32, #tpu.memory_space<vmem>>, vector<8x128xf32>
      tpu.vector_store %arg12[%241, %c0_113], %229 {strides = array<i32>} : memref<64x128xf32, #tpu.memory_space<vmem>>, vector<8x128xf32>,
    } else {
    }
    %c8_i32_104 = arith.constant 8 : i32
    %c0_105 = arith.constant 0 : index
    %c0_106 = arith.constant 0 : index
    %c0_107 = arith.constant 0 : index
    %232 = vector.load %arg10[%c0_105, %c0_106, %c0_107] : memref<1x8x128xf32, #tpu.memory_space<vmem>>, vector<1x8x128xf32>
    %233 = vector.shape_cast %232 : vector<1x8x128xf32> to vector<8x128xf32>
    %234 = vector.shape_cast %229 : vector<8x128xf32> to vector<1x8x128xf32>
    tpu.vector_store %arg10[%c0_105, %c0_106, %c0_107], %234 {strides = array<i32>} : memref<1x8x128xf32, #tpu.memory_space<vmem>>, vector<1x8x128xf32>,
    %c0_108 = arith.constant 0 : index
    %c0_109 = arith.constant 0 : index
    %c0_110 = arith.constant 0 : index
    %235 = vector.load %arg11[%c0_108, %c0_109, %c0_110] : memref<1x8x128xf32, #tpu.memory_space<vmem>>, vector<1x8x128xf32>
    %236 = vector.shape_cast %235 : vector<1x8x128xf32> to vector<8x128xf32>
    %237 = vector.shape_cast %227 : vector<8x128xf32> to vector<1x8x128xf32>
    tpu.vector_store %arg11[%c0_108, %c0_109, %c0_110], %237 {strides = array<i32>} : memref<1x8x128xf32, #tpu.memory_space<vmem>>, vector<1x8x128xf32>,
    %c1_i32_111 = arith.constant 1 : i32
    %238 = arith.cmpi eq, %arg0, %c1_i32_111 : i32
    %239 = arith.extui %238 : i1 to i32
    %c0_i32_112 = arith.constant 0 : i32
    %240 = arith.cmpi ne, %239, %c0_i32_112 : i32
    scf.if %240 {
      %241 = arith.truncf %229 : vector<8x128xf32> to vector<8x128xbf16>
      %c0_113 = arith.constant 0 : index
      %c0_114 = arith.constant 0 : index
      %242 = vector.load %arg7[%c0_113, %c0_114] : memref<128x128xbf16, #tpu.memory_space<vmem>>, vector<128x128xbf16>
      %cst_115 = arith.constant dense<0.000000e+00> : vector<8x128xf32>
      %243 = tpu.matmul %241, %242, %cst_115 {dimension_numbers = #tpu.dot_dimension_numbers<[1], [0], [0], [1], [0, 0, 1, 1], [], []>} : vector<8x128xbf16>, vector<128x128xbf16>, vector<8x128xf32> -> vector<8x128xf32>
      %c0_116 = arith.constant 0 : index
      %c0_117 = arith.constant 0 : index
      %244 = vector.load %arg8[%c0_116, %c0_117] : memref<1x128xf32, #tpu.memory_space<vmem>>, vector<1x128xf32>
      %245 = vector.broadcast %244 : vector<1x128xf32> to vector<8x128xf32>
      %246 = arith.addf %243, %245 : vector<8x128xf32>
      %247 = arith.negf %246 : vector<8x128xf32>
      %248 = math.exp %247 : vector<8x128xf32>
      %cst_118 = arith.constant 1.000000e+00 : f32
      %249 = vector.broadcast %cst_118 : f32 to vector<8x128xf32>
      %250 = arith.addf %249, %248 : vector<8x128xf32>
      %251 = arith.divf %249, %250 : vector<8x128xf32>
      %c0_119 = arith.constant 0 : index
      %c0_120 = arith.constant 0 : index
      %252 = vector.load %arg9[%c0_119, %c0_120] : memref<8x128xf32, #tpu.memory_space<vmem>>, vector<8x128xf32>
      tpu.vector_store %arg9[%c0_119, %c0_120], %251 {strides = array<i32>} : memref<8x128xf32, #tpu.memory_space<vmem>>, vector<8x128xf32>,
    } else {
    }
    return
  }
  func.func @transform_0(%arg0: i32) -> (i32, i32) {
    %c0_i32 = arith.constant 0 : i32
    %c0_i32_0 = arith.constant 0 : i32
    %c0_i32_1 = arith.constant 0 : i32
    return %c0_i32, %c0_i32_0 : i32, i32
  }
  func.func @transform_1(%arg0: i32) -> (i32, i32, i32) {
    %c0_i32 = arith.constant 0 : i32
    %c0_i32_0 = arith.constant 0 : i32
    %c0_i32_1 = arith.constant 0 : i32
    return %arg0, %c0_i32, %c0_i32_0 : i32, i32, i32
  }
  func.func @transform_2(%arg0: i32) -> (i32, i32, i32) {
    %c0_i32 = arith.constant 0 : i32
    %c0_i32_0 = arith.constant 0 : i32
    %c0_i32_1 = arith.constant 0 : i32
    return %arg0, %c0_i32, %c0_i32_0 : i32, i32, i32
  }
  func.func @transform_3(%arg0: i32) -> (i32, i32, i32) {
    %c0_i32 = arith.constant 0 : i32
    %c0_i32_0 = arith.constant 0 : i32
    %c0_i32_1 = arith.constant 0 : i32
    return %arg0, %c0_i32, %c0_i32_0 : i32, i32, i32
  }
  func.func @transform_4(%arg0: i32) -> (i32, i32, i32) {
    %c0_i32 = arith.constant 0 : i32
    %c0_i32_0 = arith.constant 0 : i32
    %c0_i32_1 = arith.constant 0 : i32
    return %arg0, %c0_i32, %c0_i32_0 : i32, i32, i32
  }
  func.func @transform_5(%arg0: i32) -> (i32, i32, i32) {
    %c0_i32 = arith.constant 0 : i32
    %c0_i32_0 = arith.constant 0 : i32
    %c0_i32_1 = arith.constant 0 : i32
    return %arg0, %c0_i32, %c0_i32_0 : i32, i32, i32
  }
  func.func @transform_6(%arg0: i32) -> (i32, i32) {
    %c0_i32 = arith.constant 0 : i32
    %c0_i32_0 = arith.constant 0 : i32
    %c0_i32_1 = arith.constant 0 : i32
    return %c0_i32, %c0_i32_0 : i32, i32
  }
  func.func @transform_7(%arg0: i32) -> (i32, i32) {
    %c0_i32 = arith.constant 0 : i32
    %c0_i32_0 = arith.constant 0 : i32
    %c0_i32_1 = arith.constant 0 : i32
    return %c0_i32, %c0_i32_0 : i32, i32
  }
  func.func @transform_8(%arg0: i32) -> (i32, i32) {
    %c0_i32 = arith.constant 0 : i32
    %c0_i32_0 = arith.constant 0 : i32
    %c0_i32_1 = arith.constant 0 : i32
    return %c0_i32, %c0_i32_0 : i32, i32
  }
  func.func @transform_9(%arg0: i32) -> (i32, i32, i32) {
    %c0_i32 = arith.constant 0 : i32
    %c0_i32_0 = arith.constant 0 : i32
    %c0_i32_1 = arith.constant 0 : i32
    return %arg0, %c0_i32, %c0_i32_0 : i32, i32, i32
  }
  func.func @transform_10(%arg0: i32) -> (i32, i32, i32) {
    %c0_i32 = arith.constant 0 : i32
    %c0_i32_0 = arith.constant 0 : i32
    %c0_i32_1 = arith.constant 0 : i32
    return %arg0, %c0_i32, %c0_i32_0 : i32, i32, i32
  }
}

</mosaic_0001>

<llo_original>
// kernel: lstm_sentiment_forward.1
$region0: #{lstm_sentiment_forward.1}
  #allocation0 [shape = 'u32[]', space=smem, size = 0x4, offset = 0x4, fixed_abs, tag = 'smem constant byte address 0x4 - core index']
  #allocation1 [shape = 'u32[144,128]{1,0:T(1,128)}', space=vmem, size = 0x12000, scoped, tag = 'internal scratch']
  #allocation2 [shape = 'f32[64,128]{1,0:T(8,128)}', space=vmem, size = 0x8000, scoped, tag = 'scratch operand']
  #allocation3 [shape = 'f32[64,128]{1,0:T(8,128)}', space=vmem, size = 0x8000, scoped, tag = 'scratch operand']
  %s0 = inlined_call_operand.vmem [shape: f32[64,128], index: 0, kind: input, shape index: {}]
  %s1 = inlined_call_operand.vmem [shape: bf16[2,128,128], index: 1, kind: input, shape index: {}]
  %s2 = inlined_call_operand.vmem [shape: bf16[2,128,128], index: 2, kind: input, shape index: {}]
  %s3 = inlined_call_operand.vmem [shape: f32[2,1,128], index: 3, kind: input, shape index: {}]
  %s4 = inlined_call_operand.vmem [shape: f32[2,8,128], index: 4, kind: input, shape index: {}]
  %s5 = inlined_call_operand.vmem [shape: f32[2,8,128], index: 5, kind: input, shape index: {}]
  %s6 = inlined_call_operand.vmem [shape: bf16[128,128], index: 6, kind: input, shape index: {}]
  %s7 = inlined_call_operand.vmem [shape: f32[1,128], index: 7, kind: input, shape index: {}]
  %s8 = inlined_call_operand.vmem [shape: f32[8,128], index: 8, kind: output, shape index: {0}]
  %s9 = inlined_call_operand.vmem [shape: f32[2,8,128], index: 9, kind: output, shape index: {1}]
  %s10 = inlined_call_operand.vmem [shape: f32[2,8,128], index: 10, kind: output, shape index: {2}]
  %11 = xla_tuple %s8, %s9, %s10
  %s12 = sld [smem:[#allocation0]]
  $region121: #{lstm_sentiment_forward.1} parent=0
    _
  %s14 = ssub.s32 1, %s12
  %s15 = scalar_select 0, %s14, %s12
  loop: start=0, step=1, limit=4
  $region2: #{lstm_sentiment_forward.1} parent=0 // loop_pre_header
    _
  $region3: #{lstm_sentiment_forward.1} parent=0 // loop_header
    %s17 = sphi 0, %s21
    %p18 = scmp.ge.s32.totalorder %s17, 4
    %s25 = sphi 0, %s25
    %s27 = sphi 0, %s25
    %s28 = sphi 0, %s27
    %s42 = sphi 0, %s28
    %s48 = sphi 0, %s50
    %s51 = sphi 0, %s48
    %s52 = sphi 0, %s51
    %s68 = sphi 0, %s52
    %s74 = sphi 0, %s76
    %s77 = sphi 0, %s74
    %s78 = sphi 0, %s77
    %s94 = sphi 0, %s78
    %s100 = sphi 0, %s102
    %s103 = sphi 0, %s100
    %s104 = sphi 0, %s103
    %s120 = sphi 0, %s104
    %s126 = sphi 0, %s128
    %s129 = sphi 0, %s126
    %s130 = sphi 0, %s129
    %s146 = sphi 0, %s130
    %s152 = sphi 0, %s154
    %s155 = sphi 0, %s152
    %s156 = sphi 0, %s155
    %s172 = sphi 0, %s156
    %s176 = sphi 0, %s176
    %s178 = sphi 0, %s176
    %s179 = sphi 0, %s178
    %s193 = sphi 0, %s179
    %s197 = sphi 0, %s197
    %s199 = sphi 0, %s197
    %s200 = sphi 0, %s199
    %s214 = sphi 0, %s200
    %s218 = sphi 0, %s218
    %s220 = sphi 0, %s218
    %s221 = sphi 0, %s220
    %s235 = sphi 0, %s221
    %s241 = sphi 0, %s243
    %s244 = sphi 0, %s241
    %s245 = sphi 0, %s244
    %s261 = sphi 0, %s245
    %s267 = sphi 0, %s269
    %s270 = sphi 0, %s267
    %s271 = sphi 0, %s270
    %s287 = sphi 0, %s271
  $region4: #{lstm_sentiment_forward.1} parent=0 // loop_header_branch
    %20 = sbr.rel (%p18) target = $region8
  $region5: #{lstm_sentiment_forward.1} parent=0 // loop_body
    %s22 = ssub.s32 %s17, 1
    %s23 = ssub.s32 %s17, 2
    %s24 = sadd.s32 %s17, 1
    %s26 = sadd.s32 %s25, 1
    %p29 = scmp.eq.s32.totalorder %s17, 1
    %p30 = scmp.ne.s32.totalorder %s25, %s27
    %p31 = scmp.eq.s32.totalorder %s17, 0
    %p32 = por %p30, %p31
    %p33 = scmp.ne.s32.totalorder %s25, %s27
    %p34 = scmp.eq.s32.totalorder %s22, 1
    %p35 = por %p33, %p34
    %p36 = scmp.ne.s32.totalorder %s27, %s28
    %p37 = scmp.eq.s32.totalorder %s22, 0
    %p38 = por %p36, %p37
    %p39 = scmp.ne.s32.totalorder %s27, %s28
    %p40 = scmp.eq.s32.totalorder %s23, 1
    %p41 = por %p39, %p40
    %p43 = scmp.ne.s32.totalorder %s28, %s42
    %p44 = scmp.eq.s32.totalorder %s23, 0
    %p45 = por %p43, %p44
    %s46 = ssub.s32 %s17, %s24
    %p47 = scmp.eq.s32.totalorder %s46, 0
    %s49 = sadd.s32 %s48, 1
    %s50 = scalar_select %p47, %s48, %s49
    %p53 = pneg %p47
    %p54 = scmp.eq.s32.totalorder %s17, 1
    %p55 = por %p53, %p54
    %p56 = scmp.ne.s32.totalorder %s48, %s51
    %p57 = scmp.eq.s32.totalorder %s17, 0
    %p58 = por %p56, %p57
    %p59 = scmp.ne.s32.totalorder %s48, %s51
    %p60 = scmp.eq.s32.totalorder %s22, 1
    %p61 = por %p59, %p60
    %p62 = scmp.ne.s32.totalorder %s51, %s52
    %p63 = scmp.eq.s32.totalorder %s22, 0
    %p64 = por %p62, %p63
    %p65 = scmp.ne.s32.totalorder %s51, %s52
    %p66 = scmp.eq.s32.totalorder %s23, 1
    %p67 = por %p65, %p66
    %p69 = scmp.ne.s32.totalorder %s52, %s68
    %p70 = scmp.eq.s32.totalorder %s23, 0
    %p71 = por %p69, %p70
    %s72 = ssub.s32 %s17, %s24
    %p73 = scmp.eq.s32.totalorder %s72, 0
    %s75 = sadd.s32 %s74, 1
    %s76 = scalar_select %p73, %s74, %s75
    %p79 = pneg %p73
    %p80 = scmp.eq.s32.totalorder %s17, 1
    %p81 = por %p79, %p80
    %p82 = scmp.ne.s32.totalorder %s74, %s77
    %p83 = scmp.eq.s32.totalorder %s17, 0
    %p84 = por %p82, %p83
    %p85 = scmp.ne.s32.totalorder %s74, %s77
    %p86 = scmp.eq.s32.totalorder %s22, 1
    %p87 = por %p85, %p86
    %p88 = scmp.ne.s32.totalorder %s77, %s78
    %p89 = scmp.eq.s32.totalorder %s22, 0
    %p90 = por %p88, %p89
    %p91 = scmp.ne.s32.totalorder %s77, %s78
    %p92 = scmp.eq.s32.totalorder %s23, 1
    %p93 = por %p91, %p92
    %p95 = scmp.ne.s32.totalorder %s78, %s94
    %p96 = scmp.eq.s32.totalorder %s23, 0
    %p97 = por %p95, %p96
    %s98 = ssub.s32 %s17, %s24
    %p99 = scmp.eq.s32.totalorder %s98, 0
    %s101 = sadd.s32 %s100, 1
    %s102 = scalar_select %p99, %s100, %s101
    %p105 = pneg %p99
    %p106 = scmp.eq.s32.totalorder %s17, 1
    %p107 = por %p105, %p106
    %p108 = scmp.ne.s32.totalorder %s100, %s103
    %p109 = scmp.eq.s32.totalorder %s17, 0
    %p110 = por %p108, %p109
    %p111 = scmp.ne.s32.totalorder %s100, %s103
    %p112 = scmp.eq.s32.totalorder %s22, 1
    %p113 = por %p111, %p112
    %p114 = scmp.ne.s32.totalorder %s103, %s104
    %p115 = scmp.eq.s32.totalorder %s22, 0
    %p116 = por %p114, %p115
    %p117 = scmp.ne.s32.totalorder %s103, %s104
    %p118 = scmp.eq.s32.totalorder %s23, 1
    %p119 = por %p117, %p118
    %p121 = scmp.ne.s32.totalorder %s104, %s120
    %p122 = scmp.eq.s32.totalorder %s23, 0
    %p123 = por %p121, %p122
    %s124 = ssub.s32 %s17, %s24
    %p125 = scmp.eq.s32.totalorder %s124, 0
    %s127 = sadd.s32 %s126, 1
    %s128 = scalar_select %p125, %s126, %s127
    %p131 = pneg %p125
    %p132 = scmp.eq.s32.totalorder %s17, 1
    %p133 = por %p131, %p132
    %p134 = scmp.ne.s32.totalorder %s126, %s129
    %p135 = scmp.eq.s32.totalorder %s17, 0
    %p136 = por %p134, %p135
    %p137 = scmp.ne.s32.totalorder %s126, %s129
    %p138 = scmp.eq.s32.totalorder %s22, 1
    %p139 = por %p137, %p138
    %p140 = scmp.ne.s32.totalorder %s129, %s130
    %p141 = scmp.eq.s32.totalorder %s22, 0
    %p142 = por %p140, %p141
    %p143 = scmp.ne.s32.totalorder %s129, %s130
    %p144 = scmp.eq.s32.totalorder %s23, 1
    %p145 = por %p143, %p144
    %p147 = scmp.ne.s32.totalorder %s130, %s146
    %p148 = scmp.eq.s32.totalorder %s23, 0
    %p149 = por %p147, %p148
    %s150 = ssub.s32 %s17, %s24
    %p151 = scmp.eq.s32.totalorder %s150, 0
    %s153 = sadd.s32 %s152, 1
    %s154 = scalar_select %p151, %s152, %s153
    %p157 = pneg %p151
    %p158 = scmp.eq.s32.totalorder %s17, 1
    %p159 = por %p157, %p158
    %p160 = scmp.ne.s32.totalorder %s152, %s155
    %p161 = scmp.eq.s32.totalorder %s17, 0
    %p162 = por %p160, %p161
    %p163 = scmp.ne.s32.totalorder %s152, %s155
    %p164 = scmp.eq.s32.totalorder %s22, 1
    %p165 = por %p163, %p164
    %p166 = scmp.ne.s32.totalorder %s155, %s156
    %p167 = scmp.eq.s32.totalorder %s22, 0
    %p168 = por %p166, %p167
    %p169 = scmp.ne.s32.totalorder %s155, %s156
    %p170 = scmp.eq.s32.totalorder %s23, 1
    %p171 = por %p169, %p170
    %p173 = scmp.ne.s32.totalorder %s156, %s172
    %p174 = scmp.eq.s32.totalorder %s23, 0
    %p175 = por %p173, %p174
    %s177 = sadd.s32 %s176, 1
    %p180 = scmp.eq.s32.totalorder %s17, 1
    %p181 = scmp.ne.s32.totalorder %s176, %s178
    %p182 = scmp.eq.s32.totalorder %s17, 0
    %p183 = por %p181, %p182
    %p184 = scmp.ne.s32.totalorder %s176, %s178
    %p185 = scmp.eq.s32.totalorder %s22, 1
    %p186 = por %p184, %p185
    %p187 = scmp.ne.s32.totalorder %s178, %s179
    %p188 = scmp.eq.s32.totalorder %s22, 0
    %p189 = por %p187, %p188
    %p190 = scmp.ne.s32.totalorder %s178, %s179
    %p191 = scmp.eq.s32.totalorder %s23, 1
    %p192 = por %p190, %p191
    %p194 = scmp.ne.s32.totalorder %s179, %s193
    %p195 = scmp.eq.s32.totalorder %s23, 0
    %p196 = por %p194, %p195
    %s198 = sadd.s32 %s197, 1
    %p201 = scmp.eq.s32.totalorder %s17, 1
    %p202 = scmp.ne.s32.totalorder %s197, %s199
    %p203 = scmp.eq.s32.totalorder %s17, 0
    %p204 = por %p202, %p203
    %p205 = scmp.ne.s32.totalorder %s197, %s199
    %p206 = scmp.eq.s32.totalorder %s22, 1
    %p207 = por %p205, %p206
    %p208 = scmp.ne.s32.totalorder %s199, %s200
    %p209 = scmp.eq.s32.totalorder %s22, 0
    %p210 = por %p208, %p209
    %p211 = scmp.ne.s32.totalorder %s199, %s200
    %p212 = scmp.eq.s32.totalorder %s23, 1
    %p213 = por %p211, %p212
    %p215 = scmp.ne.s32.totalorder %s200, %s214
    %p216 = scmp.eq.s32.totalorder %s23, 0
    %p217 = por %p215, %p216
    %s219 = sadd.s32 %s218, 1
    %p222 = scmp.eq.s32.totalorder %s17, 1
    %p223 = scmp.ne.s32.totalorder %s218, %s220
    %p224 = scmp.eq.s32.totalorder %s17, 0
    %p225 = por %p223, %p224
    %p226 = scmp.ne.s32.totalorder %s218, %s220
    %p227 = scmp.eq.s32.totalorder %s22, 1
    %p228 = por %p226, %p227
    %p229 = scmp.ne.s32.totalorder %s220, %s221
    %p230 = scmp.eq.s32.totalorder %s22, 0
    %p231 = por %p229, %p230
    %p232 = scmp.ne.s32.totalorder %s220, %s221
    %p233 = scmp.eq.s32.totalorder %s23, 1
    %p234 = por %p232, %p233
    %p236 = scmp.ne.s32.totalorder %s221, %s235
    %p237 = scmp.eq.s32.totalorder %s23, 0
    %p238 = por %p236, %p237
    %s239 = ssub.s32 %s17, %s24
    %p240 = scmp.eq.s32.totalorder %s239, 0
    %s242 = sadd.s32 %s241, 1
    %s243 = scalar_select %p240, %s241, %s242
    %p246 = pneg %p240
    %p247 = scmp.eq.s32.totalorder %s17, 1
    %p248 = por %p246, %p247
    %p249 = scmp.ne.s32.totalorder %s241, %s244
    %p250 = scmp.eq.s32.totalorder %s17, 0
    %p251 = por %p249, %p250
    %p252 = scmp.ne.s32.totalorder %s241, %s244
    %p253 = scmp.eq.s32.totalorder %s22, 1
    %p254 = por %p252, %p253
    %p255 = scmp.ne.s32.totalorder %s244, %s245
    %p256 = scmp.eq.s32.totalorder %s22, 0
    %p257 = por %p255, %p256
    %p258 = scmp.ne.s32.totalorder %s244, %s245
    %p259 = scmp.eq.s32.totalorder %s23, 1
    %p260 = por %p258, %p259
    %p262 = scmp.ne.s32.totalorder %s245, %s261
    %p263 = scmp.eq.s32.totalorder %s23, 0
    %p264 = por %p262, %p263
    %s265 = ssub.s32 %s17, %s24
    %p266 = scmp.eq.s32.totalorder %s265, 0
    %s268 = sadd.s32 %s267, 1
    %s269 = scalar_select %p266, %s267, %s268
    %p272 = pneg %p266
    %p273 = scmp.eq.s32.totalorder %s17, 1
    %p274 = por %p272, %p273
    %p275 = scmp.ne.s32.totalorder %s267, %s270
    %p276 = scmp.eq.s32.totalorder %s17, 0
    %p277 = por %p275, %p276
    %p278 = scmp.ne.s32.totalorder %s267, %s270
    %p279 = scmp.eq.s32.totalorder %s22, 1
    %p280 = por %p278, %p279
    %p281 = scmp.ne.s32.totalorder %s270, %s271
    %p282 = scmp.eq.s32.totalorder %s22, 0
    %p283 = por %p281, %p282
    %p284 = scmp.ne.s32.totalorder %s270, %s271
    %p285 = scmp.eq.s32.totalorder %s23, 1
    %p286 = por %p284, %p285
    %p288 = scmp.ne.s32.totalorder %s271, %s287
    %p289 = scmp.eq.s32.totalorder %s23, 0
    %p290 = por %p288, %p289
    %p291 = scmp.le.s32.totalorder 1, %s17
    %p292 = scmp.lt.s32.totalorder %s17, 3
    %p293 = pnand %p291, %p292
    %p294 = pneg %p293
    // Predicated region
    $region9: #{lstm_sentiment_forward.1} parent=5 // pred_check
      _
    $region10: #{lstm_sentiment_forward.1} parent=5 // pred_check_branch
      %296 = sbr.rel (%p293) target = $region12
    $region11: #{lstm_sentiment_forward.1} parent=5 // pred_region
      %s297 = ssub.s32 %s17, 1
      // Predicated region
      $region13: #{lstm_sentiment_forward.1} parent=11 // pred_check
        %p298 = pneg %p38
      $region14: #{lstm_sentiment_forward.1} parent=11 // pred_check_branch
        %300 = sbr.rel (%p298) target = $region16
      $region15: #{lstm_sentiment_forward.1} parent=11 // pred_region
        _
      $region16: #{lstm_sentiment_forward.1} parent=11 // pred_fallthru
        _
      // Predicated region
      $region17: #{lstm_sentiment_forward.1} parent=11 // pred_check
        %p301 = pneg %p189
      $region18: #{lstm_sentiment_forward.1} parent=11 // pred_check_branch
        %303 = sbr.rel (%p301) target = $region20
      $region19: #{lstm_sentiment_forward.1} parent=11 // pred_region
        _
      $region20: #{lstm_sentiment_forward.1} parent=11 // pred_fallthru
        _
      // Predicated region
      $region21: #{lstm_sentiment_forward.1} parent=11 // pred_check
        %p304 = pneg %p210
      $region22: #{lstm_sentiment_forward.1} parent=11 // pred_check_branch
        %306 = sbr.rel (%p304) target = $region24
      $region23: #{lstm_sentiment_forward.1} parent=11 // pred_region
        _
      $region24: #{lstm_sentiment_forward.1} parent=11 // pred_fallthru
        _
    $region12: #{lstm_sentiment_forward.1} parent=5 // pred_fallthru
      _
    %p307 = scmp.lt.s32.totalorder %s17, 2
    // Predicated region
    $region25: #{lstm_sentiment_forward.1} parent=5 // pred_check
      %p308 = pneg %p307
    $region26: #{lstm_sentiment_forward.1} parent=5 // pred_check_branch
      %310 = sbr.rel (%p308) target = $region28
    $region27: #{lstm_sentiment_forward.1} parent=5 // pred_region
      // Predicated region
      $region29: #{lstm_sentiment_forward.1} parent=27 // pred_check
        %p311 = pneg %p58
      $region30: #{lstm_sentiment_forward.1} parent=27 // pred_check_branch
        %313 = sbr.rel (%p311) target = $region32
      $region31: #{lstm_sentiment_forward.1} parent=27 // pred_region
        %p314 = scmp.lt.s32.totalorder %s17, 1
        %s315 = scalar_select %p314, %s17, 1
        %s316 = smul.addr %s315, 16
        %s317 = smul.addr %s316, 4
        %s318 = scalar_lea.vmem %s1, %s317
      $region32: #{lstm_sentiment_forward.1} parent=27 // pred_fallthru
        _
      // Predicated region
      $region33: #{lstm_sentiment_forward.1} parent=27 // pred_check
        %p319 = pneg %p84
      $region34: #{lstm_sentiment_forward.1} parent=27 // pred_check_branch
        %321 = sbr.rel (%p319) target = $region36
      $region35: #{lstm_sentiment_forward.1} parent=27 // pred_region
        %p322 = scmp.lt.s32.totalorder %s17, 1
        %s323 = scalar_select %p322, %s17, 1
        %s324 = smul.addr %s323, 16
        %s325 = smul.addr %s324, 4
        %s326 = scalar_lea.vmem %s2, %s325
      $region36: #{lstm_sentiment_forward.1} parent=27 // pred_fallthru
        _
      // Predicated region
      $region37: #{lstm_sentiment_forward.1} parent=27 // pred_check
        %p327 = pneg %p110
      $region38: #{lstm_sentiment_forward.1} parent=27 // pred_check_branch
        %329 = sbr.rel (%p327) target = $region40
      $region39: #{lstm_sentiment_forward.1} parent=27 // pred_region
        %p330 = scmp.lt.s32.totalorder %s17, 1
        %s331 = scalar_select %p330, %s17, 1
        %s332 = scalar_lea.vmem %s3, %s331
      $region40: #{lstm_sentiment_forward.1} parent=27 // pred_fallthru
        _
      // Predicated region
      $region41: #{lstm_sentiment_forward.1} parent=27 // pred_check
        %p333 = pneg %p136
      $region42: #{lstm_sentiment_forward.1} parent=27 // pred_check_branch
        %335 = sbr.rel (%p333) target = $region44
      $region43: #{lstm_sentiment_forward.1} parent=27 // pred_region
        %p336 = scmp.lt.s32.totalorder %s17, 1
        %s337 = scalar_select %p336, %s17, 1
        %s338 = smul.addr %s337, 8
        %s339 = scalar_lea.vmem %s4, %s338
      $region44: #{lstm_sentiment_forward.1} parent=27 // pred_fallthru
        _
      // Predicated region
      $region45: #{lstm_sentiment_forward.1} parent=27 // pred_check
        %p340 = pneg %p162
      $region46: #{lstm_sentiment_forward.1} parent=27 // pred_check_branch
        %342 = sbr.rel (%p340) target = $region48
      $region47: #{lstm_sentiment_forward.1} parent=27 // pred_region
        %p343 = scmp.lt.s32.totalorder %s17, 1
        %s344 = scalar_select %p343, %s17, 1
        %s345 = smul.addr %s344, 8
        %s346 = scalar_lea.vmem %s5, %s345
      $region48: #{lstm_sentiment_forward.1} parent=27 // pred_fallthru
        _
    $region28: #{lstm_sentiment_forward.1} parent=5 // pred_fallthru
      _
    %p347 = scmp.le.s32.totalorder 1, %s17
    %p348 = scmp.lt.s32.totalorder %s17, 3
    %p349 = pnand %p347, %p348
    %p350 = pneg %p349
    // Predicated region
    $region49: #{lstm_sentiment_forward.1} parent=5 // pred_check
      _
    $region50: #{lstm_sentiment_forward.1} parent=5 // pred_check_branch
      %352 = sbr.rel (%p349) target = $region52
    $region51: #{lstm_sentiment_forward.1} parent=5 // pred_region
      %s353 = ssub.s32 %s17, 1
      %p354 = pneg %p38
      %p355 = pneg %p35
      %p356 = scmp.lt.s32.totalorder %s22, 1
      %s357 = scalar_select %p356, %s22, 1
      %s358 = smul.addr %s357, 16
      %s359 = smul.addr %s358, 4
      %s360 = scalar_lea.vmem %s1, %s359
      %p361 = pneg %p64
      %p362 = pneg %p61
      %p363 = scmp.lt.s32.totalorder %s22, 1
      %s364 = scalar_select %p363, %s22, 1
      %s365 = smul.addr %s364, 16
      %s366 = smul.addr %s365, 4
      %s367 = scalar_lea.vmem %s2, %s366
      %p368 = pneg %p90
      %p369 = pneg %p87
      %p370 = scmp.lt.s32.totalorder %s22, 1
      %s371 = scalar_select %p370, %s22, 1
      %s372 = scalar_lea.vmem %s3, %s371
      %p373 = pneg %p116
      %p374 = pneg %p113
      %p375 = scmp.lt.s32.totalorder %s22, 1
      %s376 = scalar_select %p375, %s22, 1
      %s377 = smul.addr %s376, 8
      %s378 = scalar_lea.vmem %s4, %s377
      %p379 = pneg %p142
      %p380 = pneg %p139
      %p381 = scmp.lt.s32.totalorder %s22, 1
      %s382 = scalar_select %p381, %s22, 1
      %s383 = smul.addr %s382, 8
      %s384 = scalar_lea.vmem %s5, %s383
      %p385 = pneg %p168
      %p386 = pneg %p165
      %p387 = pneg %p189
      %p388 = pneg %p186
      %p389 = pneg %p210
      %p390 = pneg %p207
      %p391 = pneg %p231
      %p392 = pneg %p228
      %p393 = pneg %p257
      %p394 = pneg %p254
      %p395 = scmp.lt.s32.totalorder %s22, 1
      %s396 = scalar_select %p395, %s22, 1
      %s397 = smul.addr %s396, 8
      %s398 = scalar_lea.vmem %s9, %s397
      %p399 = pneg %p283
      %p400 = pneg %p280
      %p401 = scmp.lt.s32.totalorder %s22, 1
      %s402 = scalar_select %p401, %s22, 1
      %s403 = smul.addr %s402, 8
      %s404 = scalar_lea.vmem %s10, %s403
      %p405 = scmp.lt.s32.totalorder %s22, 1
      %s406 = scalar_select %p405, %s22, 1
      %s407 = smul.addr %s406, 16
      %s408 = smul.addr %s407, 4
      %s409 = scalar_lea.vmem %s1, %s408
      %p410 = scmp.lt.s32.totalorder %s22, 1
      %s411 = scalar_select %p410, %s22, 1
      %s412 = smul.addr %s411, 16
      %s413 = smul.addr %s412, 4
      %s414 = scalar_lea.vmem %s2, %s413
      %p415 = scmp.lt.s32.totalorder %s22, 1
      %s416 = scalar_select %p415, %s22, 1
      %s417 = scalar_lea.vmem %s3, %s416
      %p418 = scmp.lt.s32.totalorder %s22, 1
      %s419 = scalar_select %p418, %s22, 1
      %s420 = smul.addr %s419, 8
      %s421 = scalar_lea.vmem %s4, %s420
      %p422 = scmp.lt.s32.totalorder %s22, 1
      %s423 = scalar_select %p422, %s22, 1
      %s424 = smul.addr %s423, 8
      %s425 = scalar_lea.vmem %s5, %s424
      %p426 = scmp.lt.s32.totalorder %s22, 1
      %s427 = scalar_select %p426, %s22, 1
      %s428 = smul.addr %s427, 8
      %s429 = scalar_lea.vmem %s9, %s428
      %p430 = scmp.lt.s32.totalorder %s22, 1
      %s431 = scalar_select %p430, %s22, 1
      %s432 = smul.addr %s431, 8
      %s433 = scalar_lea.vmem %s10, %s432
      %p435 = scmp.eq.s32.totalorder %s22, 0
      // Predicated region
      $region53: #{lstm_sentiment_forward.1} parent=51 // pred_check
        %p436 = pneg %p435
      $region54: #{lstm_sentiment_forward.1} parent=51 // pred_check_branch
        %438 = sbr.rel (%p436) target = $region56
      $region55: #{lstm_sentiment_forward.1} parent=51 // pred_region
        %v439 = vld [vmem:[%s0] sm:$0xff]
        %v440 = vld [vmem:[%s0 + $0x8] sm:$0xff]
        %v441 = vld [vmem:[%s0 + $0x10] sm:$0xff]
        %v442 = vld [vmem:[%s0 + $0x18] sm:$0xff]
        %v443 = vld [vmem:[%s0 + $0x20] sm:$0xff]
        %v444 = vld [vmem:[%s0 + $0x28] sm:$0xff]
        %v445 = vld [vmem:[%s0 + $0x30] sm:$0xff]
        %v446 = vld [vmem:[%s0 + $0x38] sm:$0xff]
        %447 = vst [vmem:[#allocation2] sm:$0xff] %v439
        %448 = vst [vmem:[#allocation2 + $0x8] sm:$0xff] %v440
        %449 = vst [vmem:[#allocation2 + $0x10] sm:$0xff] %v441
        %450 = vst [vmem:[#allocation2 + $0x18] sm:$0xff] %v442
        %451 = vst [vmem:[#allocation2 + $0x20] sm:$0xff] %v443
        %452 = vst [vmem:[#allocation2 + $0x28] sm:$0xff] %v444
        %453 = vst [vmem:[#allocation2 + $0x30] sm:$0xff] %v445
        %454 = vst [vmem:[#allocation2 + $0x38] sm:$0xff] %v446
      $region56: #{lstm_sentiment_forward.1} parent=51 // pred_fallthru
        _
      %v455 = vld [vmem:[#allocation2] sm:$0xff]
      %v456 = vld [vmem:[#allocation2 + $0x8] sm:$0xff]
      %v457 = vld [vmem:[#allocation2 + $0x10] sm:$0xff]
      %v458 = vld [vmem:[#allocation2 + $0x18] sm:$0xff]
      %v459 = vld [vmem:[#allocation2 + $0x20] sm:$0xff]
      %v460 = vld [vmem:[#allocation2 + $0x28] sm:$0xff]
      %v461 = vld [vmem:[#allocation2 + $0x30] sm:$0xff]
      %v462 = vld [vmem:[#allocation2 + $0x38] sm:$0xff]
      %v463 = vpack.c.bf16 %v456, %v455
      %v464 = vpack.c.bf16 %v458, %v457
      %v465 = vpack.c.bf16 %v460, %v459
      %v466 = vpack.c.bf16 %v462, %v461
      %v467 = vld [vmem:[%s409] sm:$0xf]
      %v468 = vld [vmem:[%s409 + $0x4] sm:$0xf]
      %v469 = vld [vmem:[%s409 + $0x8] sm:$0xf]
      %v470 = vld [vmem:[%s409 + $0xc] sm:$0xf]
      %v471 = vld [vmem:[%s409 + $0x10] sm:$0xf]
      %v472 = vld [vmem:[%s409 + $0x14] sm:$0xf]
      %v473 = vld [vmem:[%s409 + $0x18] sm:$0xf]
      %v474 = vld [vmem:[%s409 + $0x1c] sm:$0xf]
      %v475 = vld [vmem:[%s409 + $0x20] sm:$0xf]
      %v476 = vld [vmem:[%s409 + $0x24] sm:$0xf]
      %v477 = vld [vmem:[%s409 + $0x28] sm:$0xf]
      %v478 = vld [vmem:[%s409 + $0x2c] sm:$0xf]
      %v479 = vld [vmem:[%s409 + $0x30] sm:$0xf]
      %v480 = vld [vmem:[%s409 + $0x34] sm:$0xf]
      %v481 = vld [vmem:[%s409 + $0x38] sm:$0xf]
      %v482 = vld [vmem:[%s409 + $0x3c] sm:$0xf]
      %v483 = vld [vmem:[%s417] sm:$0x1]
      %v485 = vlaneseq
      %v486 = vshrl.u32 %v485, 7
      %v487 = vsub.s32 0, %v486
      %v488 = vrot.slane %v483, %v487
      %v506 = vunpack.c.l.b16 %v467
      %v507 = vunpack.c.l.b16 %v468
      %v508 = vunpack.c.l.b16 %v469
      %v509 = vunpack.c.l.b16 %v470
      %v510 = vunpack.c.l.b16 %v471
      %v511 = vunpack.c.l.b16 %v472
      %v512 = vunpack.c.l.b16 %v473
      %v513 = vunpack.c.l.b16 %v474
      %v514 = vunpack.c.l.b16 %v475
      %v515 = vunpack.c.l.b16 %v476
      %v516 = vunpack.c.l.b16 %v477
      %v517 = vunpack.c.l.b16 %v478
      %v518 = vunpack.c.l.b16 %v479
      %v519 = vunpack.c.l.b16 %v480
      %v520 = vunpack.c.l.b16 %v481
      %v521 = vunpack.c.l.b16 %v482
      %v522 = vpack.c.b16 %v507, %v506
      %v523 = vpack.c.b16 %v509, %v508
      %v524 = vpack.c.b16 %v511, %v510
      %v525 = vpack.c.b16 %v513, %v512
      %v526 = vpack.c.b16 %v515, %v514
      %v527 = vpack.c.b16 %v517, %v516
      %v528 = vpack.c.b16 %v519, %v518
      %v529 = vpack.c.b16 %v521, %v520
      %538 = vmatprep.subr.bf16.mxu0 0
      %539 = vmatpush1.bf16.msra.mxu0 %v529
      %540 = vmatprep.subr.bf16.mxu0 0
      %541 = vmatpush1.bf16.msra.mxu0 %v528
      %542 = vmatprep.subr.bf16.mxu0 0
      %543 = vmatpush1.bf16.msra.mxu0 %v527
      %544 = vmatprep.subr.bf16.mxu0 0
      %545 = vmatpush1.bf16.msra.mxu0 %v526
      %546 = vmatprep.subr.bf16.mxu0 0
      %547 = vmatpush1.bf16.msra.mxu0 %v525
      %548 = vmatprep.subr.bf16.mxu0 0
      %549 = vmatpush1.bf16.msra.mxu0 %v524
      %550 = vmatprep.subr.bf16.mxu0 0
      %551 = vmatpush1.bf16.msra.mxu0 %v523
      %552 = vmatprep.subr.bf16.mxu0 0
      %553 = vmatpush1.bf16.msra.mxu0 %v522
      %554 = vmatprep.subr.bf16.mxu0 0
      %555 = vmatpush2.bf16.msra.mxu0 0
      %556 = vmatprep.subr.bf16.mxu0 0
      %557 = vmatpush2.bf16.msra.mxu0 0
      %558 = vmatprep.subr.bf16.mxu0 0
      %559 = vmatpush2.bf16.msra.mxu0 0
      %560 = vmatprep.subr.bf16.mxu0 0
      %561 = vmatpush2.bf16.msra.mxu0 0
      %562 = vmatprep.subr.bf16.mxu0 0
      %563 = vmatpush2.bf16.msra.mxu0 0
      %564 = vmatprep.subr.bf16.mxu0 0
      %565 = vmatpush2.bf16.msra.mxu0 0
      %566 = vmatprep.subr.bf16.mxu0 0
      %567 = vmatpush2.bf16.msra.mxu0 0
      %568 = vmatprep.subr.bf16.mxu0 0
      %569 = vmatpush2.bf16.msra.mxu0 0
      %570 = vmatprep.mubr.bf16.mxu0 0
      %571 = vmatmul.mubr.bf16.gmra.mxu0 %v463
      %v572 = vpop.f32.mrf.mxu0
      %v573 = vadd.f32 %v488, %v572
      %v574 = vpop.f32.mrf.mxu0
      %v575 = vpop.f32.mrf.mxu0
      %v576 = vadd.f32 %v488, %v575
      %v577 = vpop.f32.mrf.mxu0
      %578 = vmatprep.mubr.bf16.mxu0 0
      %579 = vmatmul.mubr.bf16.gmra.mxu0 %v464
      %v580 = vpop.f32.mrf.mxu0
      %v581 = vadd.f32 %v488, %v580
      %v582 = vpop.f32.mrf.mxu0
      %v583 = vpop.f32.mrf.mxu0
      %v584 = vadd.f32 %v488, %v583
      %v585 = vpop.f32.mrf.mxu0
      %586 = vmatprep.mubr.bf16.mxu0 0
      %587 = vmatmul.mubr.bf16.gmra.mxu0 %v465
      %v588 = vpop.f32.mrf.mxu0
      %v589 = vadd.f32 %v488, %v588
      %v590 = vpop.f32.mrf.mxu0
      %v591 = vpop.f32.mrf.mxu0
      %v592 = vadd.f32 %v488, %v591
      %v593 = vpop.f32.mrf.mxu0
      %594 = vmatprep.mubr.bf16.mxu0 0
      %595 = vmatmul.mubr.bf16.gmra.mxu0 %v466
      %v596 = vpop.f32.mrf.mxu0
      %v597 = vadd.f32 %v488, %v596
      %v598 = vpop.f32.mrf.mxu0
      %v599 = vpop.f32.mrf.mxu0
      %v600 = vadd.f32 %v488, %v599
      %v601 = vpop.f32.mrf.mxu0
      %602 = vdwg.mxu0
      %603 = vst [vmem:[#allocation3] sm:$0xff] %v573
      %604 = vst [vmem:[#allocation3 + $0x8] sm:$0xff] %v576
      %605 = vst [vmem:[#allocation3 + $0x10] sm:$0xff] %v581
      %606 = vst [vmem:[#allocation3 + $0x18] sm:$0xff] %v584
      %607 = vst [vmem:[#allocation3 + $0x20] sm:$0xff] %v589
      %608 = vst [vmem:[#allocation3 + $0x28] sm:$0xff] %v592
      %609 = vst [vmem:[#allocation3 + $0x30] sm:$0xff] %v597
      %610 = vst [vmem:[#allocation3 + $0x38] sm:$0xff] %v600
      %v611 = vlaneseq
      %v612 = vand.u32 %v611, 127
      %vm613 = vcmp.ge.s32.totalorder %v612, 64
      %vm614 = vcmp.lt.s32.totalorder %v612, 96
      %vm615 = vmand %vm613, %vm614
      %p616 = scmp.lt.s32.totalorder %s22, 1
      %v617 = vld [vmem:[%s421] sm:$0xff]
      %v618 = vld [vmem:[%s425] sm:$0xff]
      %v619 = vld [vmem:[#allocation3] sm:$0xff]
      %v620 = vpack.c.bf16 %v617, %v617
      %v621 = vld [vmem:[%s414] sm:$0xf]
      %v622 = vld [vmem:[%s414 + $0x4] sm:$0xf]
      %v623 = vld [vmem:[%s414 + $0x8] sm:$0xf]
      %v624 = vld [vmem:[%s414 + $0xc] sm:$0xf]
      %v625 = vld [vmem:[%s414 + $0x10] sm:$0xf]
      %v626 = vld [vmem:[%s414 + $0x14] sm:$0xf]
      %v627 = vld [vmem:[%s414 + $0x18] sm:$0xf]
      %v628 = vld [vmem:[%s414 + $0x1c] sm:$0xf]
      %v629 = vld [vmem:[%s414 + $0x20] sm:$0xf]
      %v630 = vld [vmem:[%s414 + $0x24] sm:$0xf]
      %v631 = vld [vmem:[%s414 + $0x28] sm:$0xf]
      %v632 = vld [vmem:[%s414 + $0x2c] sm:$0xf]
      %v633 = vld [vmem:[%s414 + $0x30] sm:$0xf]
      %v634 = vld [vmem:[%s414 + $0x34] sm:$0xf]
      %v635 = vld [vmem:[%s414 + $0x38] sm:$0xf]
      %v636 = vld [vmem:[%s414 + $0x3c] sm:$0xf]
      %v653 = vunpack.c.l.b16 %v621
      %v654 = vunpack.c.l.b16 %v622
      %v655 = vunpack.c.l.b16 %v623
      %v656 = vunpack.c.l.b16 %v624
      %v657 = vunpack.c.l.b16 %v625
      %v658 = vunpack.c.l.b16 %v626
      %v659 = vunpack.c.l.b16 %v627
      %v660 = vunpack.c.l.b16 %v628
      %v661 = vunpack.c.l.b16 %v629
      %v662 = vunpack.c.l.b16 %v630
      %v663 = vunpack.c.l.b16 %v631
      %v664 = vunpack.c.l.b16 %v632
      %v665 = vunpack.c.l.b16 %v633
      %v666 = vunpack.c.l.b16 %v634
      %v667 = vunpack.c.l.b16 %v635
      %v668 = vunpack.c.l.b16 %v636
      %v669 = vpack.c.b16 %v654, %v653
      %v670 = vpack.c.b16 %v656, %v655
      %v671 = vpack.c.b16 %v658, %v657
      %v672 = vpack.c.b16 %v660, %v659
      %v673 = vpack.c.b16 %v662, %v661
      %v674 = vpack.c.b16 %v664, %v663
      %v675 = vpack.c.b16 %v666, %v665
      %v676 = vpack.c.b16 %v668, %v667
      %685 = vmatprep.subr.bf16.mxu0 0
      %686 = vmatpush1.bf16.msra.mxu0 %v676
      %687 = vmatprep.subr.bf16.mxu0 0
      %688 = vmatpush1.bf16.msra.mxu0 %v675
      %689 = vmatprep.subr.bf16.mxu0 0
      %690 = vmatpush1.bf16.msra.mxu0 %v674
      %691 = vmatprep.subr.bf16.mxu0 0
      %692 = vmatpush1.bf16.msra.mxu0 %v673
      %693 = vmatprep.subr.bf16.mxu0 0
      %694 = vmatpush1.bf16.msra.mxu0 %v672
      %695 = vmatprep.subr.bf16.mxu0 0
      %696 = vmatpush1.bf16.msra.mxu0 %v671
      %697 = vmatprep.subr.bf16.mxu0 0
      %698 = vmatpush1.bf16.msra.mxu0 %v670
      %699 = vmatprep.subr.bf16.mxu0 0
      %700 = vmatpush1.bf16.msra.mxu0 %v669
      %701 = vmatprep.subr.bf16.mxu0 0
      %702 = vmatpush2.bf16.msra.mxu0 0
      %703 = vmatprep.subr.bf16.mxu0 0
      %704 = vmatpush2.bf16.msra.mxu0 0
      %705 = vmatprep.subr.bf16.mxu0 0
      %706 = vmatpush2.bf16.msra.mxu0 0
      %707 = vmatprep.subr.bf16.mxu0 0
      %708 = vmatpush2.bf16.msra.mxu0 0
      %709 = vmatprep.subr.bf16.mxu0 0
      %710 = vmatpush2.bf16.msra.mxu0 0
      %711 = vmatprep.subr.bf16.mxu0 0
      %712 = vmatpush2.bf16.msra.mxu0 0
      %713 = vmatprep.subr.bf16.mxu0 0
      %714 = vmatpush2.bf16.msra.mxu0 0
      %715 = vmatprep.subr.bf16.mxu0 0
      %716 = vmatpush2.bf16.msra.mxu0 0
      %717 = vmatprep.mubr.bf16.mxu0 0
      %718 = vmatmul.mubr.bf16.gmra.mxu0 %v620
      %v719 = vpop.f32.mrf.mxu0
      %v720 = vadd.f32 0.0, %v719
      %v721 = vpop.f32.mrf.mxu0
      %v722 = vpop.f32.mrf.mxu0
      %v723 = vpop.f32.mrf.mxu0
      %724 = vdwg.mxu0
      %v725 = vadd.f32 %v619, %v720
      %v726 = vtanh.pop %v725
      %v727 = vxor.u32 %v725, 2147483648
      %v728 = vmul.f32 %v727, 1.442695
      %v729 = vpow.pop %v728
      %v730 = vadd.f32 %v729, 1.0
      %v731 = vrcp.pop %v730
      %v732 = vmul.f32 1.0, %v731
      %v733 = vsel %vm615, %v726, %v732
      %734 = vrot.lane.b32.xlu0 %v733, 96
      %v735 = vpop.permute.xlu0 %734
      %736 = vrot.lane.b32.xlu0 %v733, 64
      %v737 = vpop.permute.xlu0 %736
      %738 = vrot.lane.b32.xlu0 %v733, 32
      %v739 = vpop.permute.xlu0 %738
      %v740 = vmul.f32 %v735, %v618
      %v741 = vmul.f32 %v733, %v737
      %v742 = vadd.f32 %v740, %v741
      %v743 = vtanh.pop %v742
      %v744 = vmul.f32 %v739, %v743
      // Predicated region
      $region57: #{lstm_sentiment_forward.1} parent=51 // pred_check
        %p745 = pneg %p616
      $region58: #{lstm_sentiment_forward.1} parent=51 // pred_check_branch
        %747 = sbr.rel (%p745) target = $region60
      $region59: #{lstm_sentiment_forward.1} parent=51 // pred_region
        %748 = vst [vmem:[#allocation2] sm:$0xff] %v744
      $region60: #{lstm_sentiment_forward.1} parent=51 // pred_fallthru
        _
      %s749 = scalar_lea.vmem [#allocation3], 8
      %v750 = vld [vmem:[%s749] sm:$0xff]
      %v751 = vpack.c.bf16 %v744, %v744
      %v752 = vld [vmem:[%s414] sm:$0xf]
      %v753 = vld [vmem:[%s414 + $0x4] sm:$0xf]
      %v754 = vld [vmem:[%s414 + $0x8] sm:$0xf]
      %v755 = vld [vmem:[%s414 + $0xc] sm:$0xf]
      %v756 = vld [vmem:[%s414 + $0x10] sm:$0xf]
      %v757 = vld [vmem:[%s414 + $0x14] sm:$0xf]
      %v758 = vld [vmem:[%s414 + $0x18] sm:$0xf]
      %v759 = vld [vmem:[%s414 + $0x1c] sm:$0xf]
      %v760 = vld [vmem:[%s414 + $0x20] sm:$0xf]
      %v761 = vld [vmem:[%s414 + $0x24] sm:$0xf]
      %v762 = vld [vmem:[%s414 + $0x28] sm:$0xf]
      %v763 = vld [vmem:[%s414 + $0x2c] sm:$0xf]
      %v764 = vld [vmem:[%s414 + $0x30] sm:$0xf]
      %v765 = vld [vmem:[%s414 + $0x34] sm:$0xf]
      %v766 = vld [vmem:[%s414 + $0x38] sm:$0xf]
      %v767 = vld [vmem:[%s414 + $0x3c] sm:$0xf]
      %v784 = vunpack.c.l.b16 %v752
      %v785 = vunpack.c.l.b16 %v753
      %v786 = vunpack.c.l.b16 %v754
      %v787 = vunpack.c.l.b16 %v755
      %v788 = vunpack.c.l.b16 %v756
      %v789 = vunpack.c.l.b16 %v757
      %v790 = vunpack.c.l.b16 %v758
      %v791 = vunpack.c.l.b16 %v759
      %v792 = vunpack.c.l.b16 %v760
      %v793 = vunpack.c.l.b16 %v761
      %v794 = vunpack.c.l.b16 %v762
      %v795 = vunpack.c.l.b16 %v763
      %v796 = vunpack.c.l.b16 %v764
      %v797 = vunpack.c.l.b16 %v765
      %v798 = vunpack.c.l.b16 %v766
      %v799 = vunpack.c.l.b16 %v767
      %v800 = vpack.c.b16 %v785, %v784
      %v801 = vpack.c.b16 %v787, %v786
      %v802 = vpack.c.b16 %v789, %v788
      %v803 = vpack.c.b16 %v791, %v790
      %v804 = vpack.c.b16 %v793, %v792
      %v805 = vpack.c.b16 %v795, %v794
      %v806 = vpack.c.b16 %v797, %v796
      %v807 = vpack.c.b16 %v799, %v798
      %816 = vmatprep.subr.bf16.mxu0 0
      %817 = vmatpush1.bf16.msra.mxu0 %v807
      %818 = vmatprep.subr.bf16.mxu0 0
      %819 = vmatpush1.bf16.msra.mxu0 %v806
      %820 = vmatprep.subr.bf16.mxu0 0
      %821 = vmatpush1.bf16.msra.mxu0 %v805
      %822 = vmatprep.subr.bf16.mxu0 0
      %823 = vmatpush1.bf16.msra.mxu0 %v804
      %824 = vmatprep.subr.bf16.mxu0 0
      %825 = vmatpush1.bf16.msra.mxu0 %v803
      %826 = vmatprep.subr.bf16.mxu0 0
      %827 = vmatpush1.bf16.msra.mxu0 %v802
      %828 = vmatprep.subr.bf16.mxu0 0
      %829 = vmatpush1.bf16.msra.mxu0 %v801
      %830 = vmatprep.subr.bf16.mxu0 0
      %831 = vmatpush1.bf16.msra.mxu0 %v800
      %832 = vmatprep.subr.bf16.mxu0 0
      %833 = vmatpush2.bf16.msra.mxu0 0
      %834 = vmatprep.subr.bf16.mxu0 0
      %835 = vmatpush2.bf16.msra.mxu0 0
      %836 = vmatprep.subr.bf16.mxu0 0
      %837 = vmatpush2.bf16.msra.mxu0 0
      %838 = vmatprep.subr.bf16.mxu0 0
      %839 = vmatpush2.bf16.msra.mxu0 0
      %840 = vmatprep.subr.bf16.mxu0 0
      %841 = vmatpush2.bf16.msra.mxu0 0
      %842 = vmatprep.subr.bf16.mxu0 0
      %843 = vmatpush2.bf16.msra.mxu0 0
      %844 = vmatprep.subr.bf16.mxu0 0
      %845 = vmatpush2.bf16.msra.mxu0 0
      %846 = vmatprep.subr.bf16.mxu0 0
      %847 = vmatpush2.bf16.msra.mxu0 0
      %848 = vmatprep.mubr.bf16.mxu0 0
      %849 = vmatmul.mubr.bf16.gmra.mxu0 %v751
      %v850 = vpop.f32.mrf.mxu0
      %v851 = vadd.f32 0.0, %v850
      %v852 = vpop.f32.mrf.mxu0
      %v853 = vpop.f32.mrf.mxu0
      %v854 = vpop.f32.mrf.mxu0
      %855 = vdwg.mxu0
      %v856 = vadd.f32 %v750, %v851
      %v857 = vtanh.pop %v856
      %v858 = vxor.u32 %v856, 2147483648
      %v859 = vmul.f32 %v858, 1.442695
      %v860 = vpow.pop %v859
      %v861 = vadd.f32 %v860, 1.0
      %v862 = vrcp.pop %v861
      %v863 = vmul.f32 1.0, %v862
      %v864 = vsel %vm615, %v857, %v863
      %865 = vrot.lane.b32.xlu0 %v864, 96
      %v866 = vpop.permute.xlu0 %865
      %867 = vrot.lane.b32.xlu0 %v864, 64
      %v868 = vpop.permute.xlu0 %867
      %869 = vrot.lane.b32.xlu0 %v864, 32
      %v870 = vpop.permute.xlu0 %869
      %v871 = vmul.f32 %v866, %v742
      %v872 = vmul.f32 %v864, %v868
      %v873 = vadd.f32 %v871, %v872
      %v874 = vtanh.pop %v873
      %v875 = vmul.f32 %v870, %v874
      // Predicated region
      $region61: #{lstm_sentiment_forward.1} parent=51 // pred_check
        %p876 = pneg %p616
      $region62: #{lstm_sentiment_forward.1} parent=51 // pred_check_branch
        %878 = sbr.rel (%p876) target = $region64
      $region63: #{lstm_sentiment_forward.1} parent=51 // pred_region
        %s879 = scalar_lea.vmem [#allocation2], 8
        %880 = vst [vmem:[%s879] sm:$0xff] %v875
      $region64: #{lstm_sentiment_forward.1} parent=51 // pred_fallthru
        _
      %s881 = scalar_lea.vmem [#allocation3], 16
      %v882 = vld [vmem:[%s881] sm:$0xff]
      %v883 = vpack.c.bf16 %v875, %v875
      %v884 = vld [vmem:[%s414] sm:$0xf]
      %v885 = vld [vmem:[%s414 + $0x4] sm:$0xf]
      %v886 = vld [vmem:[%s414 + $0x8] sm:$0xf]
      %v887 = vld [vmem:[%s414 + $0xc] sm:$0xf]
      %v888 = vld [vmem:[%s414 + $0x10] sm:$0xf]
      %v889 = vld [vmem:[%s414 + $0x14] sm:$0xf]
      %v890 = vld [vmem:[%s414 + $0x18] sm:$0xf]
      %v891 = vld [vmem:[%s414 + $0x1c] sm:$0xf]
      %v892 = vld [vmem:[%s414 + $0x20] sm:$0xf]
      %v893 = vld [vmem:[%s414 + $0x24] sm:$0xf]
      %v894 = vld [vmem:[%s414 + $0x28] sm:$0xf]
      %v895 = vld [vmem:[%s414 + $0x2c] sm:$0xf]
      %v896 = vld [vmem:[%s414 + $0x30] sm:$0xf]
      %v897 = vld [vmem:[%s414 + $0x34] sm:$0xf]
      %v898 = vld [vmem:[%s414 + $0x38] sm:$0xf]
      %v899 = vld [vmem:[%s414 + $0x3c] sm:$0xf]
      %v916 = vunpack.c.l.b16 %v884
      %v917 = vunpack.c.l.b16 %v885
      %v918 = vunpack.c.l.b16 %v886
      %v919 = vunpack.c.l.b16 %v887
      %v920 = vunpack.c.l.b16 %v888
      %v921 = vunpack.c.l.b16 %v889
      %v922 = vunpack.c.l.b16 %v890
      %v923 = vunpack.c.l.b16 %v891
      %v924 = vunpack.c.l.b16 %v892
      %v925 = vunpack.c.l.b16 %v893
      %v926 = vunpack.c.l.b16 %v894
      %v927 = vunpack.c.l.b16 %v895
      %v928 = vunpack.c.l.b16 %v896
      %v929 = vunpack.c.l.b16 %v897
      %v930 = vunpack.c.l.b16 %v898
      %v931 = vunpack.c.l.b16 %v899
      %v932 = vpack.c.b16 %v917, %v916
      %v933 = vpack.c.b16 %v919, %v918
      %v934 = vpack.c.b16 %v921, %v920
      %v935 = vpack.c.b16 %v923, %v922
      %v936 = vpack.c.b16 %v925, %v924
      %v937 = vpack.c.b16 %v927, %v926
      %v938 = vpack.c.b16 %v929, %v928
      %v939 = vpack.c.b16 %v931, %v930
      %948 = vmatprep.subr.bf16.mxu0 0
      %949 = vmatpush1.bf16.msra.mxu0 %v939
      %950 = vmatprep.subr.bf16.mxu0 0
      %951 = vmatpush1.bf16.msra.mxu0 %v938
      %952 = vmatprep.subr.bf16.mxu0 0
      %953 = vmatpush1.bf16.msra.mxu0 %v937
      %954 = vmatprep.subr.bf16.mxu0 0
      %955 = vmatpush1.bf16.msra.mxu0 %v936
      %956 = vmatprep.subr.bf16.mxu0 0
      %957 = vmatpush1.bf16.msra.mxu0 %v935
      %958 = vmatprep.subr.bf16.mxu0 0
      %959 = vmatpush1.bf16.msra.mxu0 %v934
      %960 = vmatprep.subr.bf16.mxu0 0
      %961 = vmatpush1.bf16.msra.mxu0 %v933
      %962 = vmatprep.subr.bf16.mxu0 0
      %963 = vmatpush1.bf16.msra.mxu0 %v932
      %964 = vmatprep.subr.bf16.mxu0 0
      %965 = vmatpush2.bf16.msra.mxu0 0
      %966 = vmatprep.subr.bf16.mxu0 0
      %967 = vmatpush2.bf16.msra.mxu0 0
      %968 = vmatprep.subr.bf16.mxu0 0
      %969 = vmatpush2.bf16.msra.mxu0 0
      %970 = vmatprep.subr.bf16.mxu0 0
      %971 = vmatpush2.bf16.msra.mxu0 0
      %972 = vmatprep.subr.bf16.mxu0 0
      %973 = vmatpush2.bf16.msra.mxu0 0
      %974 = vmatprep.subr.bf16.mxu0 0
      %975 = vmatpush2.bf16.msra.mxu0 0
      %976 = vmatprep.subr.bf16.mxu0 0
      %977 = vmatpush2.bf16.msra.mxu0 0
      %978 = vmatprep.subr.bf16.mxu0 0
      %979 = vmatpush2.bf16.msra.mxu0 0
      %980 = vmatprep.mubr.bf16.mxu0 0
      %981 = vmatmul.mubr.bf16.gmra.mxu0 %v883
      %v982 = vpop.f32.mrf.mxu0
      %v983 = vadd.f32 0.0, %v982
      %v984 = vpop.f32.mrf.mxu0
      %v985 = vpop.f32.mrf.mxu0
      %v986 = vpop.f32.mrf.mxu0
      %987 = vdwg.mxu0
      %v988 = vadd.f32 %v882, %v983
      %v989 = vtanh.pop %v988
      %v990 = vxor.u32 %v988, 2147483648
      %v991 = vmul.f32 %v990, 1.442695
      %v992 = vpow.pop %v991
      %v993 = vadd.f32 %v992, 1.0
      %v994 = vrcp.pop %v993
      %v995 = vmul.f32 1.0, %v994
      %v996 = vsel %vm615, %v989, %v995
      %997 = vrot.lane.b32.xlu0 %v996, 96
      %v998 = vpop.permute.xlu0 %997
      %999 = vrot.lane.b32.xlu0 %v996, 64
      %v1000 = vpop.permute.xlu0 %999
      %1001 = vrot.lane.b32.xlu0 %v996, 32
      %v1002 = vpop.permute.xlu0 %1001
      %v1003 = vmul.f32 %v998, %v873
      %v1004 = vmul.f32 %v996, %v1000
      %v1005 = vadd.f32 %v1003, %v1004
      %v1006 = vtanh.pop %v1005
      %v1007 = vmul.f32 %v1002, %v1006
      // Predicated region
      $region65: #{lstm_sentiment_forward.1} parent=51 // pred_check
        %p1008 = pneg %p616
      $region66: #{lstm_sentiment_forward.1} parent=51 // pred_check_branch
        %1010 = sbr.rel (%p1008) target = $region68
      $region67: #{lstm_sentiment_forward.1} parent=51 // pred_region
        %s1011 = scalar_lea.vmem [#allocation2], 16
        %1012 = vst [vmem:[%s1011] sm:$0xff] %v1007
      $region68: #{lstm_sentiment_forward.1} parent=51 // pred_fallthru
        _
      %s1013 = scalar_lea.vmem [#allocation3], 24
      %v1014 = vld [vmem:[%s1013] sm:$0xff]
      %v1015 = vpack.c.bf16 %v1007, %v1007
      %v1016 = vld [vmem:[%s414] sm:$0xf]
      %v1017 = vld [vmem:[%s414 + $0x4] sm:$0xf]
      %v1018 = vld [vmem:[%s414 + $0x8] sm:$0xf]
      %v1019 = vld [vmem:[%s414 + $0xc] sm:$0xf]
      %v1020 = vld [vmem:[%s414 + $0x10] sm:$0xf]
      %v1021 = vld [vmem:[%s414 + $0x14] sm:$0xf]
      %v1022 = vld [vmem:[%s414 + $0x18] sm:$0xf]
      %v1023 = vld [vmem:[%s414 + $0x1c] sm:$0xf]
      %v1024 = vld [vmem:[%s414 + $0x20] sm:$0xf]
      %v1025 = vld [vmem:[%s414 + $0x24] sm:$0xf]
      %v1026 = vld [vmem:[%s414 + $0x28] sm:$0xf]
      %v1027 = vld [vmem:[%s414 + $0x2c] sm:$0xf]
      %v1028 = vld [vmem:[%s414 + $0x30] sm:$0xf]
      %v1029 = vld [vmem:[%s414 + $0x34] sm:$0xf]
      %v1030 = vld [vmem:[%s414 + $0x38] sm:$0xf]
      %v1031 = vld [vmem:[%s414 + $0x3c] sm:$0xf]
      %v1048 = vunpack.c.l.b16 %v1016
      %v1049 = vunpack.c.l.b16 %v1017
      %v1050 = vunpack.c.l.b16 %v1018
      %v1051 = vunpack.c.l.b16 %v1019
      %v1052 = vunpack.c.l.b16 %v1020
      %v1053 = vunpack.c.l.b16 %v1021
      %v1054 = vunpack.c.l.b16 %v1022
      %v1055 = vunpack.c.l.b16 %v1023
      %v1056 = vunpack.c.l.b16 %v1024
      %v1057 = vunpack.c.l.b16 %v1025
      %v1058 = vunpack.c.l.b16 %v1026
      %v1059 = vunpack.c.l.b16 %v1027
      %v1060 = vunpack.c.l.b16 %v1028
      %v1061 = vunpack.c.l.b16 %v1029
      %v1062 = vunpack.c.l.b16 %v1030
      %v1063 = vunpack.c.l.b16 %v1031
      %v1064 = vpack.c.b16 %v1049, %v1048
      %v1065 = vpack.c.b16 %v1051, %v1050
      %v1066 = vpack.c.b16 %v1053, %v1052
      %v1067 = vpack.c.b16 %v1055, %v1054
      %v1068 = vpack.c.b16 %v1057, %v1056
      %v1069 = vpack.c.b16 %v1059, %v1058
      %v1070 = vpack.c.b16 %v1061, %v1060
      %v1071 = vpack.c.b16 %v1063, %v1062
      %1080 = vmatprep.subr.bf16.mxu0 0
      %1081 = vmatpush1.bf16.msra.mxu0 %v1071
      %1082 = vmatprep.subr.bf16.mxu0 0
      %1083 = vmatpush1.bf16.msra.mxu0 %v1070
      %1084 = vmatprep.subr.bf16.mxu0 0
      %1085 = vmatpush1.bf16.msra.mxu0 %v1069
      %1086 = vmatprep.subr.bf16.mxu0 0
      %1087 = vmatpush1.bf16.msra.mxu0 %v1068
      %1088 = vmatprep.subr.bf16.mxu0 0
      %1089 = vmatpush1.bf16.msra.mxu0 %v1067
      %1090 = vmatprep.subr.bf16.mxu0 0
      %1091 = vmatpush1.bf16.msra.mxu0 %v1066
      %1092 = vmatprep.subr.bf16.mxu0 0
      %1093 = vmatpush1.bf16.msra.mxu0 %v1065
      %1094 = vmatprep.subr.bf16.mxu0 0
      %1095 = vmatpush1.bf16.msra.mxu0 %v1064
      %1096 = vmatprep.subr.bf16.mxu0 0
      %1097 = vmatpush2.bf16.msra.mxu0 0
      %1098 = vmatprep.subr.bf16.mxu0 0
      %1099 = vmatpush2.bf16.msra.mxu0 0
      %1100 = vmatprep.subr.bf16.mxu0 0
      %1101 = vmatpush2.bf16.msra.mxu0 0
      %1102 = vmatprep.subr.bf16.mxu0 0
      %1103 = vmatpush2.bf16.msra.mxu0 0
      %1104 = vmatprep.subr.bf16.mxu0 0
      %1105 = vmatpush2.bf16.msra.mxu0 0
      %1106 = vmatprep.subr.bf16.mxu0 0
      %1107 = vmatpush2.bf16.msra.mxu0 0
      %1108 = vmatprep.subr.bf16.mxu0 0
      %1109 = vmatpush2.bf16.msra.mxu0 0
      %1110 = vmatprep.subr.bf16.mxu0 0
      %1111 = vmatpush2.bf16.msra.mxu0 0
      %1112 = vmatprep.mubr.bf16.mxu0 0
      %1113 = vmatmul.mubr.bf16.gmra.mxu0 %v1015
      %v1114 = vpop.f32.mrf.mxu0
      %v1115 = vadd.f32 0.0, %v1114
      %v1116 = vpop.f32.mrf.mxu0
      %v1117 = vpop.f32.mrf.mxu0
      %v1118 = vpop.f32.mrf.mxu0
      %1119 = vdwg.mxu0
      %v1120 = vadd.f32 %v1014, %v1115
      %v1121 = vtanh.pop %v1120
      %v1122 = vxor.u32 %v1120, 2147483648
      %v1123 = vmul.f32 %v1122, 1.442695
      %v1124 = vpow.pop %v1123
      %v1125 = vadd.f32 %v1124, 1.0
      %v1126 = vrcp.pop %v1125
      %v1127 = vmul.f32 1.0, %v1126
      %v1128 = vsel %vm615, %v1121, %v1127
      %1129 = vrot.lane.b32.xlu0 %v1128, 96
      %v1130 = vpop.permute.xlu0 %1129
      %1131 = vrot.lane.b32.xlu0 %v1128, 64
      %v1132 = vpop.permute.xlu0 %1131
      %1133 = vrot.lane.b32.xlu0 %v1128, 32
      %v1134 = vpop.permute.xlu0 %1133
      %v1135 = vmul.f32 %v1130, %v1005
      %v1136 = vmul.f32 %v1128, %v1132
      %v1137 = vadd.f32 %v1135, %v1136
      %v1138 = vtanh.pop %v1137
      %v1139 = vmul.f32 %v1134, %v1138
      // Predicated region
      $region69: #{lstm_sentiment_forward.1} parent=51 // pred_check
        %p1140 = pneg %p616
      $region70: #{lstm_sentiment_forward.1} parent=51 // pred_check_branch
        %1142 = sbr.rel (%p1140) target = $region72
      $region71: #{lstm_sentiment_forward.1} parent=51 // pred_region
        %s1143 = scalar_lea.vmem [#allocation2], 24
        %1144 = vst [vmem:[%s1143] sm:$0xff] %v1139
      $region72: #{lstm_sentiment_forward.1} parent=51 // pred_fallthru
        _
      %s1145 = scalar_lea.vmem [#allocation3], 32
      %v1146 = vld [vmem:[%s1145] sm:$0xff]
      %v1147 = vpack.c.bf16 %v1139, %v1139
      %v1148 = vld [vmem:[%s414] sm:$0xf]
      %v1149 = vld [vmem:[%s414 + $0x4] sm:$0xf]
      %v1150 = vld [vmem:[%s414 + $0x8] sm:$0xf]
      %v1151 = vld [vmem:[%s414 + $0xc] sm:$0xf]
      %v1152 = vld [vmem:[%s414 + $0x10] sm:$0xf]
      %v1153 = vld [vmem:[%s414 + $0x14] sm:$0xf]
      %v1154 = vld [vmem:[%s414 + $0x18] sm:$0xf]
      %v1155 = vld [vmem:[%s414 + $0x1c] sm:$0xf]
      %v1156 = vld [vmem:[%s414 + $0x20] sm:$0xf]
      %v1157 = vld [vmem:[%s414 + $0x24] sm:$0xf]
      %v1158 = vld [vmem:[%s414 + $0x28] sm:$0xf]
      %v1159 = vld [vmem:[%s414 + $0x2c] sm:$0xf]
      %v1160 = vld [vmem:[%s414 + $0x30] sm:$0xf]
      %v1161 = vld [vmem:[%s414 + $0x34] sm:$0xf]
      %v1162 = vld [vmem:[%s414 + $0x38] sm:$0xf]
      %v1163 = vld [vmem:[%s414 + $0x3c] sm:$0xf]
      %v1180 = vunpack.c.l.b16 %v1148
      %v1181 = vunpack.c.l.b16 %v1149
      %v1182 = vunpack.c.l.b16 %v1150
      %v1183 = vunpack.c.l.b16 %v1151
      %v1184 = vunpack.c.l.b16 %v1152
      %v1185 = vunpack.c.l.b16 %v1153
      %v1186 = vunpack.c.l.b16 %v1154
      %v1187 = vunpack.c.l.b16 %v1155
      %v1188 = vunpack.c.l.b16 %v1156
      %v1189 = vunpack.c.l.b16 %v1157
      %v1190 = vunpack.c.l.b16 %v1158
      %v1191 = vunpack.c.l.b16 %v1159
      %v1192 = vunpack.c.l.b16 %v1160
      %v1193 = vunpack.c.l.b16 %v1161
      %v1194 = vunpack.c.l.b16 %v1162
      %v1195 = vunpack.c.l.b16 %v1163
      %v1196 = vpack.c.b16 %v1181, %v1180
      %v1197 = vpack.c.b16 %v1183, %v1182
      %v1198 = vpack.c.b16 %v1185, %v1184
      %v1199 = vpack.c.b16 %v1187, %v1186
      %v1200 = vpack.c.b16 %v1189, %v1188
      %v1201 = vpack.c.b16 %v1191, %v1190
      %v1202 = vpack.c.b16 %v1193, %v1192
      %v1203 = vpack.c.b16 %v1195, %v1194
      %1212 = vmatprep.subr.bf16.mxu0 0
      %1213 = vmatpush1.bf16.msra.mxu0 %v1203
      %1214 = vmatprep.subr.bf16.mxu0 0
      %1215 = vmatpush1.bf16.msra.mxu0 %v1202
      %1216 = vmatprep.subr.bf16.mxu0 0
      %1217 = vmatpush1.bf16.msra.mxu0 %v1201
      %1218 = vmatprep.subr.bf16.mxu0 0
      %1219 = vmatpush1.bf16.msra.mxu0 %v1200
      %1220 = vmatprep.subr.bf16.mxu0 0
      %1221 = vmatpush1.bf16.msra.mxu0 %v1199
      %1222 = vmatprep.subr.bf16.mxu0 0
      %1223 = vmatpush1.bf16.msra.mxu0 %v1198
      %1224 = vmatprep.subr.bf16.mxu0 0
      %1225 = vmatpush1.bf16.msra.mxu0 %v1197
      %1226 = vmatprep.subr.bf16.mxu0 0
      %1227 = vmatpush1.bf16.msra.mxu0 %v1196
      %1228 = vmatprep.subr.bf16.mxu0 0
      %1229 = vmatpush2.bf16.msra.mxu0 0
      %1230 = vmatprep.subr.bf16.mxu0 0
      %1231 = vmatpush2.bf16.msra.mxu0 0
      %1232 = vmatprep.subr.bf16.mxu0 0
      %1233 = vmatpush2.bf16.msra.mxu0 0
      %1234 = vmatprep.subr.bf16.mxu0 0
      %1235 = vmatpush2.bf16.msra.mxu0 0
      %1236 = vmatprep.subr.bf16.mxu0 0
      %1237 = vmatpush2.bf16.msra.mxu0 0
      %1238 = vmatprep.subr.bf16.mxu0 0
      %1239 = vmatpush2.bf16.msra.mxu0 0
      %1240 = vmatprep.subr.bf16.mxu0 0
      %1241 = vmatpush2.bf16.msra.mxu0 0
      %1242 = vmatprep.subr.bf16.mxu0 0
      %1243 = vmatpush2.bf16.msra.mxu0 0
      %1244 = vmatprep.mubr.bf16.mxu0 0
      %1245 = vmatmul.mubr.bf16.gmra.mxu0 %v1147
      %v1246 = vpop.f32.mrf.mxu0
      %v1247 = vadd.f32 0.0, %v1246
      %v1248 = vpop.f32.mrf.mxu0
      %v1249 = vpop.f32.mrf.mxu0
      %v1250 = vpop.f32.mrf.mxu0
      %1251 = vdwg.mxu0
      %v1252 = vadd.f32 %v1146, %v1247
      %v1253 = vtanh.pop %v1252
      %v1254 = vxor.u32 %v1252, 2147483648
      %v1255 = vmul.f32 %v1254, 1.442695
      %v1256 = vpow.pop %v1255
      %v1257 = vadd.f32 %v1256, 1.0
      %v1258 = vrcp.pop %v1257
      %v1259 = vmul.f32 1.0, %v1258
      %v1260 = vsel %vm615, %v1253, %v1259
      %1261 = vrot.lane.b32.xlu0 %v1260, 96
      %v1262 = vpop.permute.xlu0 %1261
      %1263 = vrot.lane.b32.xlu0 %v1260, 64
      %v1264 = vpop.permute.xlu0 %1263
      %1265 = vrot.lane.b32.xlu0 %v1260, 32
      %v1266 = vpop.permute.xlu0 %1265
      %v1267 = vmul.f32 %v1262, %v1137
      %v1268 = vmul.f32 %v1260, %v1264
      %v1269 = vadd.f32 %v1267, %v1268
      %v1270 = vtanh.pop %v1269
      %v1271 = vmul.f32 %v1266, %v1270
      // Predicated region
      $region73: #{lstm_sentiment_forward.1} parent=51 // pred_check
        %p1272 = pneg %p616
      $region74: #{lstm_sentiment_forward.1} parent=51 // pred_check_branch
        %1274 = sbr.rel (%p1272) target = $region76
      $region75: #{lstm_sentiment_forward.1} parent=51 // pred_region
        %s1275 = scalar_lea.vmem [#allocation2], 32
        %1276 = vst [vmem:[%s1275] sm:$0xff] %v1271
      $region76: #{lstm_sentiment_forward.1} parent=51 // pred_fallthru
        _
      %s1277 = scalar_lea.vmem [#allocation3], 40
      %v1278 = vld [vmem:[%s1277] sm:$0xff]
      %v1279 = vpack.c.bf16 %v1271, %v1271
      %v1280 = vld [vmem:[%s414] sm:$0xf]
      %v1281 = vld [vmem:[%s414 + $0x4] sm:$0xf]
      %v1282 = vld [vmem:[%s414 + $0x8] sm:$0xf]
      %v1283 = vld [vmem:[%s414 + $0xc] sm:$0xf]
      %v1284 = vld [vmem:[%s414 + $0x10] sm:$0xf]
      %v1285 = vld [vmem:[%s414 + $0x14] sm:$0xf]
      %v1286 = vld [vmem:[%s414 + $0x18] sm:$0xf]
      %v1287 = vld [vmem:[%s414 + $0x1c] sm:$0xf]
      %v1288 = vld [vmem:[%s414 + $0x20] sm:$0xf]
      %v1289 = vld [vmem:[%s414 + $0x24] sm:$0xf]
      %v1290 = vld [vmem:[%s414 + $0x28] sm:$0xf]
      %v1291 = vld [vmem:[%s414 + $0x2c] sm:$0xf]
      %v1292 = vld [vmem:[%s414 + $0x30] sm:$0xf]
      %v1293 = vld [vmem:[%s414 + $0x34] sm:$0xf]
      %v1294 = vld [vmem:[%s414 + $0x38] sm:$0xf]
      %v1295 = vld [vmem:[%s414 + $0x3c] sm:$0xf]
      %v1312 = vunpack.c.l.b16 %v1280
      %v1313 = vunpack.c.l.b16 %v1281
      %v1314 = vunpack.c.l.b16 %v1282
      %v1315 = vunpack.c.l.b16 %v1283
      %v1316 = vunpack.c.l.b16 %v1284
      %v1317 = vunpack.c.l.b16 %v1285
      %v1318 = vunpack.c.l.b16 %v1286
      %v1319 = vunpack.c.l.b16 %v1287
      %v1320 = vunpack.c.l.b16 %v1288
      %v1321 = vunpack.c.l.b16 %v1289
      %v1322 = vunpack.c.l.b16 %v1290
      %v1323 = vunpack.c.l.b16 %v1291
      %v1324 = vunpack.c.l.b16 %v1292
      %v1325 = vunpack.c.l.b16 %v1293
      %v1326 = vunpack.c.l.b16 %v1294
      %v1327 = vunpack.c.l.b16 %v1295
      %v1328 = vpack.c.b16 %v1313, %v1312
      %v1329 = vpack.c.b16 %v1315, %v1314
      %v1330 = vpack.c.b16 %v1317, %v1316
      %v1331 = vpack.c.b16 %v1319, %v1318
      %v1332 = vpack.c.b16 %v1321, %v1320
      %v1333 = vpack.c.b16 %v1323, %v1322
      %v1334 = vpack.c.b16 %v1325, %v1324
      %v1335 = vpack.c.b16 %v1327, %v1326
      %1344 = vmatprep.subr.bf16.mxu0 0
      %1345 = vmatpush1.bf16.msra.mxu0 %v1335
      %1346 = vmatprep.subr.bf16.mxu0 0
      %1347 = vmatpush1.bf16.msra.mxu0 %v1334
      %1348 = vmatprep.subr.bf16.mxu0 0
      %1349 = vmatpush1.bf16.msra.mxu0 %v1333
      %1350 = vmatprep.subr.bf16.mxu0 0
      %1351 = vmatpush1.bf16.msra.mxu0 %v1332
      %1352 = vmatprep.subr.bf16.mxu0 0
      %1353 = vmatpush1.bf16.msra.mxu0 %v1331
      %1354 = vmatprep.subr.bf16.mxu0 0
      %1355 = vmatpush1.bf16.msra.mxu0 %v1330
      %1356 = vmatprep.subr.bf16.mxu0 0
      %1357 = vmatpush1.bf16.msra.mxu0 %v1329
      %1358 = vmatprep.subr.bf16.mxu0 0
      %1359 = vmatpush1.bf16.msra.mxu0 %v1328
      %1360 = vmatprep.subr.bf16.mxu0 0
      %1361 = vmatpush2.bf16.msra.mxu0 0
      %1362 = vmatprep.subr.bf16.mxu0 0
      %1363 = vmatpush2.bf16.msra.mxu0 0
      %1364 = vmatprep.subr.bf16.mxu0 0
      %1365 = vmatpush2.bf16.msra.mxu0 0
      %1366 = vmatprep.subr.bf16.mxu0 0
      %1367 = vmatpush2.bf16.msra.mxu0 0
      %1368 = vmatprep.subr.bf16.mxu0 0
      %1369 = vmatpush2.bf16.msra.mxu0 0
      %1370 = vmatprep.subr.bf16.mxu0 0
      %1371 = vmatpush2.bf16.msra.mxu0 0
      %1372 = vmatprep.subr.bf16.mxu0 0
      %1373 = vmatpush2.bf16.msra.mxu0 0
      %1374 = vmatprep.subr.bf16.mxu0 0
      %1375 = vmatpush2.bf16.msra.mxu0 0
      %1376 = vmatprep.mubr.bf16.mxu0 0
      %1377 = vmatmul.mubr.bf16.gmra.mxu0 %v1279
      %v1378 = vpop.f32.mrf.mxu0
      %v1379 = vadd.f32 0.0, %v1378
      %v1380 = vpop.f32.mrf.mxu0
      %v1381 = vpop.f32.mrf.mxu0
      %v1382 = vpop.f32.mrf.mxu0
      %1383 = vdwg.mxu0
      %v1384 = vadd.f32 %v1278, %v1379
      %v1385 = vtanh.pop %v1384
      %v1386 = vxor.u32 %v1384, 2147483648
      %v1387 = vmul.f32 %v1386, 1.442695
      %v1388 = vpow.pop %v1387
      %v1389 = vadd.f32 %v1388, 1.0
      %v1390 = vrcp.pop %v1389
      %v1391 = vmul.f32 1.0, %v1390
      %v1392 = vsel %vm615, %v1385, %v1391
      %1393 = vrot.lane.b32.xlu0 %v1392, 96
      %v1394 = vpop.permute.xlu0 %1393
      %1395 = vrot.lane.b32.xlu0 %v1392, 64
      %v1396 = vpop.permute.xlu0 %1395
      %1397 = vrot.lane.b32.xlu0 %v1392, 32
      %v1398 = vpop.permute.xlu0 %1397
      %v1399 = vmul.f32 %v1394, %v1269
      %v1400 = vmul.f32 %v1392, %v1396
      %v1401 = vadd.f32 %v1399, %v1400
      %v1402 = vtanh.pop %v1401
      %v1403 = vmul.f32 %v1398, %v1402
      // Predicated region
      $region77: #{lstm_sentiment_forward.1} parent=51 // pred_check
        %p1404 = pneg %p616
      $region78: #{lstm_sentiment_forward.1} parent=51 // pred_check_branch
        %1406 = sbr.rel (%p1404) target = $region80
      $region79: #{lstm_sentiment_forward.1} parent=51 // pred_region
        %s1407 = scalar_lea.vmem [#allocation2], 40
        %1408 = vst [vmem:[%s1407] sm:$0xff] %v1403
      $region80: #{lstm_sentiment_forward.1} parent=51 // pred_fallthru
        _
      %s1409 = scalar_lea.vmem [#allocation3], 48
      %v1410 = vld [vmem:[%s1409] sm:$0xff]
      %v1411 = vpack.c.bf16 %v1403, %v1403
      %v1412 = vld [vmem:[%s414] sm:$0xf]
      %v1413 = vld [vmem:[%s414 + $0x4] sm:$0xf]
      %v1414 = vld [vmem:[%s414 + $0x8] sm:$0xf]
      %v1415 = vld [vmem:[%s414 + $0xc] sm:$0xf]
      %v1416 = vld [vmem:[%s414 + $0x10] sm:$0xf]
      %v1417 = vld [vmem:[%s414 + $0x14] sm:$0xf]
      %v1418 = vld [vmem:[%s414 + $0x18] sm:$0xf]
      %v1419 = vld [vmem:[%s414 + $0x1c] sm:$0xf]
      %v1420 = vld [vmem:[%s414 + $0x20] sm:$0xf]
      %v1421 = vld [vmem:[%s414 + $0x24] sm:$0xf]
      %v1422 = vld [vmem:[%s414 + $0x28] sm:$0xf]
      %v1423 = vld [vmem:[%s414 + $0x2c] sm:$0xf]
      %v1424 = vld [vmem:[%s414 + $0x30] sm:$0xf]
      %v1425 = vld [vmem:[%s414 + $0x34] sm:$0xf]
      %v1426 = vld [vmem:[%s414 + $0x38] sm:$0xf]
      %v1427 = vld [vmem:[%s414 + $0x3c] sm:$0xf]
      %v1444 = vunpack.c.l.b16 %v1412
      %v1445 = vunpack.c.l.b16 %v1413
      %v1446 = vunpack.c.l.b16 %v1414
      %v1447 = vunpack.c.l.b16 %v1415
      %v1448 = vunpack.c.l.b16 %v1416
      %v1449 = vunpack.c.l.b16 %v1417
      %v1450 = vunpack.c.l.b16 %v1418
      %v1451 = vunpack.c.l.b16 %v1419
      %v1452 = vunpack.c.l.b16 %v1420
      %v1453 = vunpack.c.l.b16 %v1421
      %v1454 = vunpack.c.l.b16 %v1422
      %v1455 = vunpack.c.l.b16 %v1423
      %v1456 = vunpack.c.l.b16 %v1424
      %v1457 = vunpack.c.l.b16 %v1425
      %v1458 = vunpack.c.l.b16 %v1426
      %v1459 = vunpack.c.l.b16 %v1427
      %v1460 = vpack.c.b16 %v1445, %v1444
      %v1461 = vpack.c.b16 %v1447, %v1446
      %v1462 = vpack.c.b16 %v1449, %v1448
      %v1463 = vpack.c.b16 %v1451, %v1450
      %v1464 = vpack.c.b16 %v1453, %v1452
      %v1465 = vpack.c.b16 %v1455, %v1454
      %v1466 = vpack.c.b16 %v1457, %v1456
      %v1467 = vpack.c.b16 %v1459, %v1458
      %1476 = vmatprep.subr.bf16.mxu0 0
      %1477 = vmatpush1.bf16.msra.mxu0 %v1467
      %1478 = vmatprep.subr.bf16.mxu0 0
      %1479 = vmatpush1.bf16.msra.mxu0 %v1466
      %1480 = vmatprep.subr.bf16.mxu0 0
      %1481 = vmatpush1.bf16.msra.mxu0 %v1465
      %1482 = vmatprep.subr.bf16.mxu0 0
      %1483 = vmatpush1.bf16.msra.mxu0 %v1464
      %1484 = vmatprep.subr.bf16.mxu0 0
      %1485 = vmatpush1.bf16.msra.mxu0 %v1463
      %1486 = vmatprep.subr.bf16.mxu0 0
      %1487 = vmatpush1.bf16.msra.mxu0 %v1462
      %1488 = vmatprep.subr.bf16.mxu0 0
      %1489 = vmatpush1.bf16.msra.mxu0 %v1461
      %1490 = vmatprep.subr.bf16.mxu0 0
      %1491 = vmatpush1.bf16.msra.mxu0 %v1460
      %1492 = vmatprep.subr.bf16.mxu0 0
      %1493 = vmatpush2.bf16.msra.mxu0 0
      %1494 = vmatprep.subr.bf16.mxu0 0
      %1495 = vmatpush2.bf16.msra.mxu0 0
      %1496 = vmatprep.subr.bf16.mxu0 0
      %1497 = vmatpush2.bf16.msra.mxu0 0
      %1498 = vmatprep.subr.bf16.mxu0 0
      %1499 = vmatpush2.bf16.msra.mxu0 0
      %1500 = vmatprep.subr.bf16.mxu0 0
      %1501 = vmatpush2.bf16.msra.mxu0 0
      %1502 = vmatprep.subr.bf16.mxu0 0
      %1503 = vmatpush2.bf16.msra.mxu0 0
      %1504 = vmatprep.subr.bf16.mxu0 0
      %1505 = vmatpush2.bf16.msra.mxu0 0
      %1506 = vmatprep.subr.bf16.mxu0 0
      %1507 = vmatpush2.bf16.msra.mxu0 0
      %1508 = vmatprep.mubr.bf16.mxu0 0
      %1509 = vmatmul.mubr.bf16.gmra.mxu0 %v1411
      %v1510 = vpop.f32.mrf.mxu0
      %v1511 = vadd.f32 0.0, %v1510
      %v1512 = vpop.f32.mrf.mxu0
      %v1513 = vpop.f32.mrf.mxu0
      %v1514 = vpop.f32.mrf.mxu0
      %1515 = vdwg.mxu0
      %v1516 = vadd.f32 %v1410, %v1511
      %v1517 = vtanh.pop %v1516
      %v1518 = vxor.u32 %v1516, 2147483648
      %v1519 = vmul.f32 %v1518, 1.442695
      %v1520 = vpow.pop %v1519
      %v1521 = vadd.f32 %v1520, 1.0
      %v1522 = vrcp.pop %v1521
      %v1523 = vmul.f32 1.0, %v1522
      %v1524 = vsel %vm615, %v1517, %v1523
      %1525 = vrot.lane.b32.xlu0 %v1524, 96
      %v1526 = vpop.permute.xlu0 %1525
      %1527 = vrot.lane.b32.xlu0 %v1524, 64
      %v1528 = vpop.permute.xlu0 %1527
      %1529 = vrot.lane.b32.xlu0 %v1524, 32
      %v1530 = vpop.permute.xlu0 %1529
      %v1531 = vmul.f32 %v1526, %v1401
      %v1532 = vmul.f32 %v1524, %v1528
      %v1533 = vadd.f32 %v1531, %v1532
      %v1534 = vtanh.pop %v1533
      %v1535 = vmul.f32 %v1530, %v1534
      // Predicated region
      $region81: #{lstm_sentiment_forward.1} parent=51 // pred_check
        %p1536 = pneg %p616
      $region82: #{lstm_sentiment_forward.1} parent=51 // pred_check_branch
        %1538 = sbr.rel (%p1536) target = $region84
      $region83: #{lstm_sentiment_forward.1} parent=51 // pred_region
        %s1539 = scalar_lea.vmem [#allocation2], 48
        %1540 = vst [vmem:[%s1539] sm:$0xff] %v1535
      $region84: #{lstm_sentiment_forward.1} parent=51 // pred_fallthru
        _
      %s1541 = scalar_lea.vmem [#allocation3], 56
      %v1542 = vld [vmem:[%s1541] sm:$0xff]
      %v1543 = vpack.c.bf16 %v1535, %v1535
      %v1544 = vld [vmem:[%s414] sm:$0xf]
      %v1545 = vld [vmem:[%s414 + $0x4] sm:$0xf]
      %v1546 = vld [vmem:[%s414 + $0x8] sm:$0xf]
      %v1547 = vld [vmem:[%s414 + $0xc] sm:$0xf]
      %v1548 = vld [vmem:[%s414 + $0x10] sm:$0xf]
      %v1549 = vld [vmem:[%s414 + $0x14] sm:$0xf]
      %v1550 = vld [vmem:[%s414 + $0x18] sm:$0xf]
      %v1551 = vld [vmem:[%s414 + $0x1c] sm:$0xf]
      %v1552 = vld [vmem:[%s414 + $0x20] sm:$0xf]
      %v1553 = vld [vmem:[%s414 + $0x24] sm:$0xf]
      %v1554 = vld [vmem:[%s414 + $0x28] sm:$0xf]
      %v1555 = vld [vmem:[%s414 + $0x2c] sm:$0xf]
      %v1556 = vld [vmem:[%s414 + $0x30] sm:$0xf]
      %v1557 = vld [vmem:[%s414 + $0x34] sm:$0xf]
      %v1558 = vld [vmem:[%s414 + $0x38] sm:$0xf]
      %v1559 = vld [vmem:[%s414 + $0x3c] sm:$0xf]
      %v1576 = vunpack.c.l.b16 %v1544
      %v1577 = vunpack.c.l.b16 %v1545
      %v1578 = vunpack.c.l.b16 %v1546
      %v1579 = vunpack.c.l.b16 %v1547
      %v1580 = vunpack.c.l.b16 %v1548
      %v1581 = vunpack.c.l.b16 %v1549
      %v1582 = vunpack.c.l.b16 %v1550
      %v1583 = vunpack.c.l.b16 %v1551
      %v1584 = vunpack.c.l.b16 %v1552
      %v1585 = vunpack.c.l.b16 %v1553
      %v1586 = vunpack.c.l.b16 %v1554
      %v1587 = vunpack.c.l.b16 %v1555
      %v1588 = vunpack.c.l.b16 %v1556
      %v1589 = vunpack.c.l.b16 %v1557
      %v1590 = vunpack.c.l.b16 %v1558
      %v1591 = vunpack.c.l.b16 %v1559
      %v1592 = vpack.c.b16 %v1577, %v1576
      %v1593 = vpack.c.b16 %v1579, %v1578
      %v1594 = vpack.c.b16 %v1581, %v1580
      %v1595 = vpack.c.b16 %v1583, %v1582
      %v1596 = vpack.c.b16 %v1585, %v1584
      %v1597 = vpack.c.b16 %v1587, %v1586
      %v1598 = vpack.c.b16 %v1589, %v1588
      %v1599 = vpack.c.b16 %v1591, %v1590
      %1608 = vmatprep.subr.bf16.mxu0 0
      %1609 = vmatpush1.bf16.msra.mxu0 %v1599
      %1610 = vmatprep.subr.bf16.mxu0 0
      %1611 = vmatpush1.bf16.msra.mxu0 %v1598
      %1612 = vmatprep.subr.bf16.mxu0 0
      %1613 = vmatpush1.bf16.msra.mxu0 %v1597
      %1614 = vmatprep.subr.bf16.mxu0 0
      %1615 = vmatpush1.bf16.msra.mxu0 %v1596
      %1616 = vmatprep.subr.bf16.mxu0 0
      %1617 = vmatpush1.bf16.msra.mxu0 %v1595
      %1618 = vmatprep.subr.bf16.mxu0 0
      %1619 = vmatpush1.bf16.msra.mxu0 %v1594
      %1620 = vmatprep.subr.bf16.mxu0 0
      %1621 = vmatpush1.bf16.msra.mxu0 %v1593
      %1622 = vmatprep.subr.bf16.mxu0 0
      %1623 = vmatpush1.bf16.msra.mxu0 %v1592
      %1624 = vmatprep.subr.bf16.mxu0 0
      %1625 = vmatpush2.bf16.msra.mxu0 0
      %1626 = vmatprep.subr.bf16.mxu0 0
      %1627 = vmatpush2.bf16.msra.mxu0 0
      %1628 = vmatprep.subr.bf16.mxu0 0
      %1629 = vmatpush2.bf16.msra.mxu0 0
      %1630 = vmatprep.subr.bf16.mxu0 0
      %1631 = vmatpush2.bf16.msra.mxu0 0
      %1632 = vmatprep.subr.bf16.mxu0 0
      %1633 = vmatpush2.bf16.msra.mxu0 0
      %1634 = vmatprep.subr.bf16.mxu0 0
      %1635 = vmatpush2.bf16.msra.mxu0 0
      %1636 = vmatprep.subr.bf16.mxu0 0
      %1637 = vmatpush2.bf16.msra.mxu0 0
      %1638 = vmatprep.subr.bf16.mxu0 0
      %1639 = vmatpush2.bf16.msra.mxu0 0
      %1640 = vmatprep.mubr.bf16.mxu0 0
      %1641 = vmatmul.mubr.bf16.gmra.mxu0 %v1543
      %v1642 = vpop.f32.mrf.mxu0
      %v1643 = vadd.f32 0.0, %v1642
      %v1644 = vpop.f32.mrf.mxu0
      %v1645 = vpop.f32.mrf.mxu0
      %v1646 = vpop.f32.mrf.mxu0
      %1647 = vdwg.mxu0
      %v1648 = vadd.f32 %v1542, %v1643
      %v1649 = vtanh.pop %v1648
      %v1650 = vxor.u32 %v1648, 2147483648
      %v1651 = vmul.f32 %v1650, 1.442695
      %v1652 = vpow.pop %v1651
      %v1653 = vadd.f32 %v1652, 1.0
      %v1654 = vrcp.pop %v1653
      %v1655 = vmul.f32 1.0, %v1654
      %v1656 = vsel %vm615, %v1649, %v1655
      %1657 = vrot.lane.b32.xlu0 %v1656, 96
      %v1658 = vpop.permute.xlu0 %1657
      %1659 = vrot.lane.b32.xlu0 %v1656, 64
      %v1660 = vpop.permute.xlu0 %1659
      %1661 = vrot.lane.b32.xlu0 %v1656, 32
      %v1662 = vpop.permute.xlu0 %1661
      %v1663 = vmul.f32 %v1658, %v1533
      %v1664 = vmul.f32 %v1656, %v1660
      %v1665 = vadd.f32 %v1663, %v1664
      %v1666 = vtanh.pop %v1665
      %v1667 = vmul.f32 %v1662, %v1666
      // Predicated region
      $region85: #{lstm_sentiment_forward.1} parent=51 // pred_check
        %p1668 = pneg %p616
      $region86: #{lstm_sentiment_forward.1} parent=51 // pred_check_branch
        %1670 = sbr.rel (%p1668) target = $region88
      $region87: #{lstm_sentiment_forward.1} parent=51 // pred_region
        %s1671 = scalar_lea.vmem [#allocation2], 56
        %1672 = vst [vmem:[%s1671] sm:$0xff] %v1667
      $region88: #{lstm_sentiment_forward.1} parent=51 // pred_fallthru
        _
      %1673 = vst [vmem:[%s429] sm:$0xff] %v1667
      %1674 = vst [vmem:[%s433] sm:$0xff] %v1665
      %p1675 = scmp.eq.s32.totalorder %s22, 1
      // Predicated region
      $region89: #{lstm_sentiment_forward.1} parent=51 // pred_check
        %p1676 = pneg %p1675
      $region90: #{lstm_sentiment_forward.1} parent=51 // pred_check_branch
        %1678 = sbr.rel (%p1676) target = $region92
      $region91: #{lstm_sentiment_forward.1} parent=51 // pred_region
        %v1679 = vpack.c.bf16 %v1667, %v1667
        %v1680 = vld [vmem:[%s6] sm:$0xf]
        %v1681 = vld [vmem:[%s6 + $0x4] sm:$0xf]
        %v1682 = vld [vmem:[%s6 + $0x8] sm:$0xf]
        %v1683 = vld [vmem:[%s6 + $0xc] sm:$0xf]
        %v1684 = vld [vmem:[%s6 + $0x10] sm:$0xf]
        %v1685 = vld [vmem:[%s6 + $0x14] sm:$0xf]
        %v1686 = vld [vmem:[%s6 + $0x18] sm:$0xf]
        %v1687 = vld [vmem:[%s6 + $0x1c] sm:$0xf]
        %v1688 = vld [vmem:[%s6 + $0x20] sm:$0xf]
        %v1689 = vld [vmem:[%s6 + $0x24] sm:$0xf]
        %v1690 = vld [vmem:[%s6 + $0x28] sm:$0xf]
        %v1691 = vld [vmem:[%s6 + $0x2c] sm:$0xf]
        %v1692 = vld [vmem:[%s6 + $0x30] sm:$0xf]
        %v1693 = vld [vmem:[%s6 + $0x34] sm:$0xf]
        %v1694 = vld [vmem:[%s6 + $0x38] sm:$0xf]
        %v1695 = vld [vmem:[%s6 + $0x3c] sm:$0xf]
        %v1696 = vld [vmem:[%s7] sm:$0x1]
        %v1698 = vlaneseq
        %v1699 = vshrl.u32 %v1698, 7
        %v1700 = vsub.s32 0, %v1699
        %v1701 = vrot.slane %v1696, %v1700
        %v1719 = vunpack.c.l.b16 %v1680
        %v1720 = vunpack.c.l.b16 %v1681
        %v1721 = vunpack.c.l.b16 %v1682
        %v1722 = vunpack.c.l.b16 %v1683
        %v1723 = vunpack.c.l.b16 %v1684
        %v1724 = vunpack.c.l.b16 %v1685
        %v1725 = vunpack.c.l.b16 %v1686
        %v1726 = vunpack.c.l.b16 %v1687
        %v1727 = vunpack.c.l.b16 %v1688
        %v1728 = vunpack.c.l.b16 %v1689
        %v1729 = vunpack.c.l.b16 %v1690
        %v1730 = vunpack.c.l.b16 %v1691
        %v1731 = vunpack.c.l.b16 %v1692
        %v1732 = vunpack.c.l.b16 %v1693
        %v1733 = vunpack.c.l.b16 %v1694
        %v1734 = vunpack.c.l.b16 %v1695
        %v1735 = vpack.c.b16 %v1720, %v1719
        %v1736 = vpack.c.b16 %v1722, %v1721
        %v1737 = vpack.c.b16 %v1724, %v1723
        %v1738 = vpack.c.b16 %v1726, %v1725
        %v1739 = vpack.c.b16 %v1728, %v1727
        %v1740 = vpack.c.b16 %v1730, %v1729
        %v1741 = vpack.c.b16 %v1732, %v1731
        %v1742 = vpack.c.b16 %v1734, %v1733
        %1751 = vmatprep.subr.bf16.mxu0 0
        %1752 = vmatpush1.bf16.msra.mxu0 %v1742
        %1753 = vmatprep.subr.bf16.mxu0 0
        %1754 = vmatpush1.bf16.msra.mxu0 %v1741
        %1755 = vmatprep.subr.bf16.mxu0 0
        %1756 = vmatpush1.bf16.msra.mxu0 %v1740
        %1757 = vmatprep.subr.bf16.mxu0 0
        %1758 = vmatpush1.bf16.msra.mxu0 %v1739
        %1759 = vmatprep.subr.bf16.mxu0 0
        %1760 = vmatpush1.bf16.msra.mxu0 %v1738
        %1761 = vmatprep.subr.bf16.mxu0 0
        %1762 = vmatpush1.bf16.msra.mxu0 %v1737
        %1763 = vmatprep.subr.bf16.mxu0 0
        %1764 = vmatpush1.bf16.msra.mxu0 %v1736
        %1765 = vmatprep.subr.bf16.mxu0 0
        %1766 = vmatpush1.bf16.msra.mxu0 %v1735
        %1767 = vmatprep.subr.bf16.mxu0 0
        %1768 = vmatpush2.bf16.msra.mxu0 0
        %1769 = vmatprep.subr.bf16.mxu0 0
        %1770 = vmatpush2.bf16.msra.mxu0 0
        %1771 = vmatprep.subr.bf16.mxu0 0
        %1772 = vmatpush2.bf16.msra.mxu0 0
        %1773 = vmatprep.subr.bf16.mxu0 0
        %1774 = vmatpush2.bf16.msra.mxu0 0
        %1775 = vmatprep.subr.bf16.mxu0 0
        %1776 = vmatpush2.bf16.msra.mxu0 0
        %1777 = vmatprep.subr.bf16.mxu0 0
        %1778 = vmatpush2.bf16.msra.mxu0 0
        %1779 = vmatprep.subr.bf16.mxu0 0
        %1780 = vmatpush2.bf16.msra.mxu0 0
        %1781 = vmatprep.subr.bf16.mxu0 0
        %1782 = vmatpush2.bf16.msra.mxu0 0
        %1783 = vmatprep.mubr.bf16.mxu0 0
        %1784 = vmatmul.mubr.bf16.gmra.mxu0 %v1679
        %v1785 = vpop.f32.mrf.mxu0
        %v1786 = vadd.f32 %v1701, %v1785
        %v1787 = vpop.f32.mrf.mxu0
        %v1788 = vpop.f32.mrf.mxu0
        %v1789 = vpop.f32.mrf.mxu0
        %1790 = vdwg.mxu0
        %v1791 = vxor.u32 %v1786, 2147483648
        %v1792 = vmul.f32 %v1791, 1.442695
        %v1793 = vpow.pop %v1792
        %v1794 = vadd.f32 %v1793, 1.0
        %v1795 = vrcp.pop %v1794
        %v1796 = vmul.f32 1.0, %v1795
        %1797 = vst [vmem:[%s8] sm:$0xff] %v1796
      $region92: #{lstm_sentiment_forward.1} parent=51 // pred_fallthru
        _
      %p1798 = scmp.lt.s32.totalorder %s22, 1
      %s1799 = scalar_select %p1798, %s22, 1
      %s1800 = smul.addr %s1799, 8
      %s1801 = scalar_lea.vmem %s9, %s1800
      %p1802 = scmp.lt.s32.totalorder %s22, 1
      %s1803 = scalar_select %p1802, %s22, 1
      %s1804 = smul.addr %s1803, 8
      %s1805 = scalar_lea.vmem %s10, %s1804
      // Predicated region
      $region93: #{lstm_sentiment_forward.1} parent=51 // pred_check
        %p1806 = pneg %p228
      $region94: #{lstm_sentiment_forward.1} parent=51 // pred_check_branch
        %1808 = sbr.rel (%p1806) target = $region96
      $region95: #{lstm_sentiment_forward.1} parent=51 // pred_region
        _
      $region96: #{lstm_sentiment_forward.1} parent=51 // pred_fallthru
        _
      // Predicated region
      $region97: #{lstm_sentiment_forward.1} parent=51 // pred_check
        %p1809 = pneg %p254
      $region98: #{lstm_sentiment_forward.1} parent=51 // pred_check_branch
        %1811 = sbr.rel (%p1809) target = $region100
      $region99: #{lstm_sentiment_forward.1} parent=51 // pred_region
        _
      $region100: #{lstm_sentiment_forward.1} parent=51 // pred_fallthru
        _
      // Predicated region
      $region101: #{lstm_sentiment_forward.1} parent=51 // pred_check
        %p1812 = pneg %p280
      $region102: #{lstm_sentiment_forward.1} parent=51 // pred_check_branch
        %1814 = sbr.rel (%p1812) target = $region104
      $region103: #{lstm_sentiment_forward.1} parent=51 // pred_region
        _
      $region104: #{lstm_sentiment_forward.1} parent=51 // pred_fallthru
        _
      // Predicated region
      $region105: #{lstm_sentiment_forward.1} parent=51 // pred_check
        %p1815 = pneg %p228
      $region106: #{lstm_sentiment_forward.1} parent=51 // pred_check_branch
        %1817 = sbr.rel (%p1815) target = $region108
      $region107: #{lstm_sentiment_forward.1} parent=51 // pred_region
        _
      $region108: #{lstm_sentiment_forward.1} parent=51 // pred_fallthru
        _
    $region52: #{lstm_sentiment_forward.1} parent=5 // pred_fallthru
      _
    %p1818 = scmp.le.s32.totalorder 2, %s17
    // Predicated region
    $region109: #{lstm_sentiment_forward.1} parent=5 // pred_check
      %p1819 = pneg %p1818
    $region110: #{lstm_sentiment_forward.1} parent=5 // pred_check_branch
      %1821 = sbr.rel (%p1819) target = $region112
    $region111: #{lstm_sentiment_forward.1} parent=5 // pred_region
      %s1822 = ssub.s32 %s17, 2
      // Predicated region
      $region113: #{lstm_sentiment_forward.1} parent=111 // pred_check
        %p1823 = pneg %p260
      $region114: #{lstm_sentiment_forward.1} parent=111 // pred_check_branch
        %1825 = sbr.rel (%p1823) target = $region116
      $region115: #{lstm_sentiment_forward.1} parent=111 // pred_region
        %p1826 = scmp.lt.s32.totalorder %s23, 1
        %s1827 = scalar_select %p1826, %s23, 1
        %s1828 = smul.addr %s1827, 8
        %s1829 = scalar_lea.vmem %s9, %s1828
      $region116: #{lstm_sentiment_forward.1} parent=111 // pred_fallthru
        _
      // Predicated region
      $region117: #{lstm_sentiment_forward.1} parent=111 // pred_check
        %p1830 = pneg %p286
      $region118: #{lstm_sentiment_forward.1} parent=111 // pred_check_branch
        %1832 = sbr.rel (%p1830) target = $region120
      $region119: #{lstm_sentiment_forward.1} parent=111 // pred_region
        %p1833 = scmp.lt.s32.totalorder %s23, 1
        %s1834 = scalar_select %p1833, %s23, 1
        %s1835 = smul.addr %s1834, 8
        %s1836 = scalar_lea.vmem %s10, %s1835
      $region120: #{lstm_sentiment_forward.1} parent=111 // pred_fallthru
        _
    $region112: #{lstm_sentiment_forward.1} parent=5 // pred_fallthru
      _
  $region6: #{lstm_sentiment_forward.1} parent=0 // loop_footer
    %s21 = sadd.s32 1, %s17
  $region7: #{lstm_sentiment_forward.1} parent=0 // loop_footer_branch
    %16 = sbr.rel target = $region3
  $region8: #{lstm_sentiment_forward.1} parent=0 // loop_exit
    _

</llo_original>
